<compile_context>
chip_gen: v5e
topology: v5e:2x2
jax: 0.10.0
libtpu: 0.0.40
codegen_flags: <defaults>
</compile_context>

<pallas_src>
import jax
import jax.numpy as jnp
import numpy as np
from jax import lax
from jax.experimental import pallas as pl
from jax.experimental.pallas import tpu as pltpu


# -----------------------------------------------------------------------------
# Host-side helpers: boundary masks and BN-folded weight packing
# -----------------------------------------------------------------------------
def _tap_masks(H, W, dil, pad, K=3):
    """Validity mask per tap for 'same' conv with zero padding, flattened HW."""
    m = np.zeros((K * K, H * W), np.float32)
    for ky in range(K):
        for kx in range(K):
            dy, dx = ky * dil - pad, kx * dil - pad
            yv = np.arange(H)[:, None] + dy
            xv = np.arange(W)[None, :] + dx
            valid = (yv >= 0) & (yv < H) & (xv >= 0) & (xv < W)
            m[ky * K + kx] = valid.astype(np.float32).reshape(-1)
    return jnp.asarray(m)


def _fold_bn(gamma, beta, mean, var, eps=1e-5):
    scale = gamma / jnp.sqrt(var + eps)
    bias = beta - mean * scale
    return scale.astype(jnp.float32), bias.astype(jnp.float32)


def _pack3x3(w_oihw, scale, bias):
    # (Cout, Cin, K, K) -> fold BN scale -> (Cout, K*K*Cin), tap-major.
    cout, cin, k, _ = w_oihw.shape
    wf = w_oihw * scale[:, None, None, None]
    wp = jnp.transpose(wf, (0, 2, 3, 1)).reshape(cout, k * k * cin)
    return wp, bias.reshape(cout, 1)


def _pack1x1(w_oihw, scale, bias):
    cout, cin = w_oihw.shape[:2]
    wp = w_oihw.reshape(cout, cin) * scale[:, None]
    return wp, bias.reshape(cout, 1)


def _pick_batch_tile(N, HW, max_c, budget_bytes=4 * 1024 * 1024):
    """Images per grid step; dominant VMEM cost is the im2col slab + acts."""
    per_img = (9 + 8) * max_c * HW * 4
    nb = max(1, min(N, budget_bytes // max(per_img, 1)))
    while N % nb:
        nb -= 1
    return nb


# -----------------------------------------------------------------------------
# Fused Pallas kernel: whole residual block, VMEM-resident intermediates
# -----------------------------------------------------------------------------
def _make_block_kernel(H, W, NB, cin, cout, has_shortcut):
    HW = H * W
    L = NB * HW          # fused lane axis: NB images side by side
    K = 3

    def conv3x3(h, w, bias, masks, dil, pad, slab_ref):
        # h: (c, L). Build im2col slab (K*K*c, L) in VMEM scratch, then one MXU
        # matmul with contraction depth K*K*c over all NB images at once.
        c = h.shape[0]
        for ky in range(K):
            for kx in range(K):
                t = ky * K + kx
                dy = ky * dil - pad
                dx = kx * dil - pad
                off = dy * W + dx
                if off == 0:
                    piece = h
                else:
                    # piece[q] = h[q + off]; wrapped / out-of-image / cross-
                    # image lanes are zeroed by the precomputed padding mask.
                    piece = pltpu.roll(h, shift=(-off) % L, axis=1)
                if not (dy == 0 and dx == 0):      # centre tap: mask is all 1s
                    piece = piece * masks[t:t + 1, :]
                slab_ref[pl.ds(t * c, c), :] = piece
        slab = slab_ref[pl.ds(0, K * K * c), :]
        return jnp.dot(w, slab, preferred_element_type=jnp.float32) + bias

    def kernel(*refs):
        if has_shortcut:
            (x_ref, m1_ref, m2_ref, w1_ref, b1_ref, w2_ref, b2_ref,
             w3_ref, b3_ref, ws_ref, bs_ref, o_ref, xcat_ref, slab_ref) = refs
        else:
            (x_ref, m1_ref, m2_ref, w1_ref, b1_ref, w2_ref, b2_ref,
             w3_ref, b3_ref, o_ref, xcat_ref, slab_ref) = refs

        # Fold NB images onto the lane axis: (NB, Cin, HW) -> (Cin, NB*HW).
        # Stores land at lane offsets i*HW (multiples of 128) -> unmasked vst.
        for i in range(NB):
            xcat_ref[:, pl.ds(i * HW, HW)] = x_ref[i].astype(jnp.float32)
        x = xcat_ref[...]                       # (cin, L) lane-dense

        m1 = m1_ref[...]                        # (9, L) masks for dil=1,pad=1
        m2 = m2_ref[...]                        # (9, L) masks for dil=2,pad=2

        # Shortcut: 1x1 conv + folded BN (or identity passthrough).
        if has_shortcut:
            identity = (jnp.dot(ws_ref[...], x,
                                preferred_element_type=jnp.float32)
                        + bs_ref[...])
        else:
            identity = x

        # conv1 -> bn1 -> relu
        h1 = jnp.maximum(
            conv3x3(x, w1_ref[...], b1_ref[...], m1, 1, 1, slab_ref), 0.0)
        # conv2 (dilation=2) -> bn2 -> relu
        h2 = jnp.maximum(
            conv3x3(h1, w2_ref[...], b2_ref[...], m2, 2, 2, slab_ref), 0.0)
        # conv3 -> bn3 -> +identity -> relu
        h3 = conv3x3(h2, w3_ref[...], b3_ref[...], m1, 1, 1, slab_ref)
        out = jnp.maximum(h3 + identity, 0.0)

        # Un-fold the batch: per-image lane-dense stores (256-lane slices at
        # 128-aligned static offsets).
        for i in range(NB):
            o_ref[i] = out[:, i * HW:(i + 1) * HW].astype(o_ref.dtype)

    return kernel


@jax.jit
def color_residual_block(x_nchw, params):
    N, Cin, H, W = x_nchw.shape
    HW = H * W
    Cout = params["w1"].shape[0]
    has_shortcut = "ws" in params
    NB = _pick_batch_tile(N, HW, max(Cin, Cout))
    L = NB * HW

    # Fold BN into weights/bias and pack taps for the im2col matmul.
    w1, b1 = _pack3x3(params["w1"], *params["bn1"])
    w2, b2 = _pack3x3(params["w2"], *params["bn2"])
    w3, b3 = _pack3x3(params["w3"], *params["bn3"])

    # Per-image boundary masks, tiled across the NB fused images.
    m1 = jnp.tile(_tap_masks(H, W, dil=1, pad=1), (1, NB))   # conv1 / conv3
    m2 = jnp.tile(_tap_masks(H, W, dil=2, pad=2), (1, NB))   # conv2 (dilated)

    # NCHW is already the lane-dense layout we want: (N, C, H*W).
    x = x_nchw.reshape(N, Cin, HW)

    args = [x, m1, m2, w1, b1, w2, b2, w3, b3]
    in_specs = [
        pl.BlockSpec((NB, Cin, HW), lambda n: (n, 0, 0)),
        pl.BlockSpec((9, L), lambda n: (0, 0)),
        pl.BlockSpec((9, L), lambda n: (0, 0)),
        pl.BlockSpec((Cout, 9 * Cin), lambda n: (0, 0)),
        pl.BlockSpec((Cout, 1), lambda n: (0, 0)),
        pl.BlockSpec((Cout, 9 * Cout), lambda n: (0, 0)),
        pl.BlockSpec((Cout, 1), lambda n: (0, 0)),
        pl.BlockSpec((Cout, 9 * Cout), lambda n: (0, 0)),
        pl.BlockSpec((Cout, 1), lambda n: (0, 0)),
    ]
    if has_shortcut:
        ws, bs = _pack1x1(params["ws"], *params["bns"])
        args += [ws, bs]
        in_specs += [pl.BlockSpec((Cout, Cin), lambda n: (0, 0)),
                     pl.BlockSpec((Cout, 1), lambda n: (0, 0))]

    kernel = _make_block_kernel(H, W, NB, Cin, Cout, has_shortcut)

    out = pl.pallas_call(
        kernel,
        out_shape=jax.ShapeDtypeStruct((N, Cout, HW), x_nchw.dtype),
        grid=(N // NB,),
        in_specs=in_specs,
        out_specs=pl.BlockSpec((NB, Cout, HW), lambda n: (n, 0, 0)),
        scratch_shapes=[
            pltpu.VMEM((Cin, L), jnp.float32),                  # batch-folded x
            pltpu.VMEM((9 * max(Cin, Cout), L), jnp.float32),   # im2col slab
        ],
        compiler_params=pltpu.CompilerParams(
            dimension_semantics=("parallel",)),
    )(*args)

    return out.reshape(N, Cout, H, W)


# -----------------------------------------------------------------------------
# Parameter setup (deterministic, synthetic)
# -----------------------------------------------------------------------------
def _bn_params(key, c):
    k1, k2, k3, k4 = jax.random.split(key, 4)
    gamma = jax.random.uniform(k1, (c,), jnp.float32, 0.5, 1.5)
    beta = jax.random.normal(k2, (c,), jnp.float32) * 0.1
    mean = jax.random.normal(k3, (c,), jnp.float32) * 0.1
    var = jax.random.uniform(k4, (c,), jnp.float32, 0.5, 1.5)
    return _fold_bn(gamma, beta, mean, var)


def init_params(key, in_channels, out_channels, stride=1):
    assert stride == 1  # TODO(synk): stride != 1 not implemented
    ks = jax.random.split(key, 8)
    p = {
        "w1": jax.random.normal(ks[0], (out_channels, in_channels, 3, 3),
                                jnp.float32) * 0.1,
        "bn1": _bn_params(ks[1], out_channels),
        "w2": jax.random.normal(ks[2], (out_channels, out_channels, 3, 3),
                                jnp.float32) * 0.1,
        "bn2": _bn_params(ks[3], out_channels),
        "w3": jax.random.normal(ks[4], (out_channels, out_channels, 3, 3),
                                jnp.float32) * 0.1,
        "bn3": _bn_params(ks[5], out_channels),
    }
    if stride != 1 or in_channels != out_channels:
        p["ws"] = jax.random.normal(ks[6], (out_channels, in_channels, 1, 1),
                                    jnp.float32) * 0.1
        p["bns"] = _bn_params(ks[7], out_channels)
    return p


# -----------------------------------------------------------------------------
# Pure-JAX reference (lax conv) for correctness check
# -----------------------------------------------------------------------------
def _ref_conv(x, w_oihw, dil, pad):
    return lax.conv_general_dilated(
        x, w_oihw, window_strides=(1, 1), padding=((pad, pad), (pad, pad)),
        rhs_dilation=(dil, dil), dimension_numbers=("NCHW", "OIHW", "NCHW"))


def reference_block(x, params):
    def bn(y, sb):
        s, b = sb
        return y * s[None, :, None, None] + b[None, :, None, None]

    if "ws" in params:
        identity = bn(_ref_conv(x, params["ws"], 1, 0), params["bns"])
    else:
        identity = x
    out = jnp.maximum(bn(_ref_conv(x, params["w1"], 1, 1), params["bn1"]), 0.0)
    out = jnp.maximum(bn(_ref_conv(out, params["w2"], 2, 2), params["bn2"]), 0.0)
    out = jnp.maximum(bn(_ref_conv(out, params["w3"], 1, 1), params["bn3"])
                      + identity, 0.0)
    return out


if __name__ == "__main__":
    key = jax.random.PRNGKey(0)
    kx, kp = jax.random.split(key)

    N, Cin, Cout, H, W = 2, 4, 8, 16, 16
    x = jax.random.normal(kx, (N, Cin, H, W), jnp.float32)   # NCHW like PyTorch
    params = init_params(kp, Cin, Cout, stride=1)

    out = jax.block_until_ready(color_residual_block(x, params))
    ref = jax.block_until_ready(reference_block(x, params))

    assert out.shape == (N, Cout, H, W), out.shape
    np.testing.assert_allclose(np.asarray(out), np.asarray(ref),
                               rtol=1e-4, atol=1e-4)

    print("KERNEL_OK")
</pallas_src>

<mosaic_0001>
module attributes {stable_mosaic.version = 11 : i64} {
  func.func @kernel(%arg0: i32, %arg1: memref<2x4x256xf32, #tpu.memory_space<vmem>>, %arg2: memref<9x512xf32, #tpu.memory_space<vmem>>, %arg3: memref<9x512xf32, #tpu.memory_space<vmem>>, %arg4: memref<8x36xf32, #tpu.memory_space<vmem>>, %arg5: memref<8x1xf32, #tpu.memory_space<vmem>>, %arg6: memref<8x72xf32, #tpu.memory_space<vmem>>, %arg7: memref<8x1xf32, #tpu.memory_space<vmem>>, %arg8: memref<8x72xf32, #tpu.memory_space<vmem>>, %arg9: memref<8x1xf32, #tpu.memory_space<vmem>>, %arg10: memref<8x4xf32, #tpu.memory_space<vmem>>, %arg11: memref<8x1xf32, #tpu.memory_space<vmem>>, %arg12: memref<2x8x256xf32, #tpu.memory_space<vmem>>, %arg13: memref<4x512xf32, #tpu.memory_space<vmem>>, %arg14: memref<72x512xf32, #tpu.memory_space<vmem>>) attributes {dimension_semantics = [#tpu.dimension_semantics<parallel>], iteration_bounds = array<i64: 1>, scalar_prefetch = 0 : i64, scratch_operands = 2 : i64, tpu.core_type = #tpu.core_type<tc>, window_params = [{transform_indices = @transform_0, window_bounds = array<i64: 2, 4, 256>}, {pipeline_mode = #tpu.pipeline_mode<synchronous>, transform_indices = @transform_1, window_bounds = array<i64: 9, 512>}, {pipeline_mode = #tpu.pipeline_mode<synchronous>, transform_indices = @transform_2, window_bounds = array<i64: 9, 512>}, {pipeline_mode = #tpu.pipeline_mode<synchronous>, transform_indices = @transform_3, window_bounds = array<i64: 8, 36>}, {pipeline_mode = #tpu.pipeline_mode<synchronous>, transform_indices = @transform_4, window_bounds = array<i64: 8, 1>}, {pipeline_mode = #tpu.pipeline_mode<synchronous>, transform_indices = @transform_5, window_bounds = array<i64: 8, 72>}, {pipeline_mode = #tpu.pipeline_mode<synchronous>, transform_indices = @transform_6, window_bounds = array<i64: 8, 1>}, {pipeline_mode = #tpu.pipeline_mode<synchronous>, transform_indices = @transform_7, window_bounds = array<i64: 8, 72>}, {pipeline_mode = #tpu.pipeline_mode<synchronous>, transform_indices = @transform_8, window_bounds = array<i64: 8, 1>}, {pipeline_mode = #tpu.pipeline_mode<synchronous>, transform_indices = @transform_9, window_bounds = array<i64: 8, 4>}, {pipeline_mode = #tpu.pipeline_mode<synchronous>, transform_indices = @transform_10, window_bounds = array<i64: 8, 1>}, {transform_indices = @transform_11, window_bounds = array<i64: 2, 8, 256>}]} {
    %c0 = arith.constant 0 : index
    %c0_0 = arith.constant 0 : index
    %c0_1 = arith.constant 0 : index
    %0 = vector.load %arg1[%c0, %c0_0, %c0_1] : memref<2x4x256xf32, #tpu.memory_space<vmem>>, vector<1x4x256xf32>
    %1 = vector.shape_cast %0 : vector<1x4x256xf32> to vector<4x256xf32>
    %c0_2 = arith.constant 0 : index
    %c0_3 = arith.constant 0 : index
    %2 = vector.load %arg13[%c0_2, %c0_3] : memref<4x512xf32, #tpu.memory_space<vmem>>, vector<4x256xf32>
    tpu.vector_store %arg13[%c0_2, %c0_3], %1 {strides = array<i32>} : memref<4x512xf32, #tpu.memory_space<vmem>>, vector<4x256xf32>,
    %c1 = arith.constant 1 : index
    %c0_4 = arith.constant 0 : index
    %c0_5 = arith.constant 0 : index
    %3 = vector.load %arg1[%c1, %c0_4, %c0_5] : memref<2x4x256xf32, #tpu.memory_space<vmem>>, vector<1x4x256xf32>
    %4 = vector.shape_cast %3 : vector<1x4x256xf32> to vector<4x256xf32>
    %c0_6 = arith.constant 0 : index
    %c256 = arith.constant 256 : index
    %5 = vector.load %arg13[%c0_6, %c256] : memref<4x512xf32, #tpu.memory_space<vmem>>, vector<4x256xf32>
    tpu.vector_store %arg13[%c0_6, %c256], %4 {strides = array<i32>} : memref<4x512xf32, #tpu.memory_space<vmem>>, vector<4x256xf32>,
    %c0_7 = arith.constant 0 : index
    %c0_8 = arith.constant 0 : index
    %6 = vector.load %arg13[%c0_7, %c0_8] : memref<4x512xf32, #tpu.memory_space<vmem>>, vector<4x512xf32>
    %c0_9 = arith.constant 0 : index
    %c0_10 = arith.constant 0 : index
    %7 = vector.load %arg2[%c0_9, %c0_10] : memref<9x512xf32, #tpu.memory_space<vmem>>, vector<9x512xf32>
    %c0_11 = arith.constant 0 : index
    %c0_12 = arith.constant 0 : index
    %8 = vector.load %arg3[%c0_11, %c0_12] : memref<9x512xf32, #tpu.memory_space<vmem>>, vector<9x512xf32>
    %c0_13 = arith.constant 0 : index
    %c0_14 = arith.constant 0 : index
    %9 = vector.load %arg10[%c0_13, %c0_14] : memref<8x4xf32, #tpu.memory_space<vmem>>, vector<8x4xf32>
    %cst = arith.constant dense<0.000000e+00> : vector<8x512xf32>
    %10 = tpu.matmul %9, %6, %cst {dimension_numbers = #tpu.dot_dimension_numbers<[1], [0], [0], [1], [0, 0, 1, 1], [], []>} : vector<8x4xf32>, vector<4x512xf32>, vector<8x512xf32> -> vector<8x512xf32>
    %c0_15 = arith.constant 0 : index
    %c0_16 = arith.constant 0 : index
    %11 = vector.load %arg11[%c0_15, %c0_16] : memref<8x1xf32, #tpu.memory_space<vmem>>, vector<8x1xf32>
    %12 = vector.broadcast %11 : vector<8x1xf32> to vector<8x512xf32>
    %13 = arith.addf %10, %12 : vector<8x512xf32>
    %c0_17 = arith.constant 0 : index
    %c0_18 = arith.constant 0 : index
    %14 = vector.load %arg4[%c0_17, %c0_18] : memref<8x36xf32, #tpu.memory_space<vmem>>, vector<8x36xf32>
    %c0_19 = arith.constant 0 : index
    %c0_20 = arith.constant 0 : index
    %15 = vector.load %arg5[%c0_19, %c0_20] : memref<8x1xf32, #tpu.memory_space<vmem>>, vector<8x1xf32>
    %c17_i32 = arith.constant 17 : i32
    %16 = tpu.dynamic_rotate %6 by %c17_i32 dim 1 : vector<4x512xf32>, i32 -> vector<4x512xf32>
    %17 = vector.extract_strided_slice %7 {offsets = [0, 0], sizes = [1, 512], strides = [1, 1]} : vector<9x512xf32> to vector<1x512xf32>
    %18 = vector.broadcast %17 : vector<1x512xf32> to vector<4x512xf32>
    %19 = arith.mulf %16, %18 : vector<4x512xf32>
    %c0_21 = arith.constant 0 : index
    %c0_22 = arith.constant 0 : index
    %20 = vector.load %arg14[%c0_21, %c0_22] : memref<72x512xf32, #tpu.memory_space<vmem>>, vector<4x512xf32>
    tpu.vector_store %arg14[%c0_21, %c0_22], %19 {strides = array<i32>} : memref<72x512xf32, #tpu.memory_space<vmem>>, vector<4x512xf32>,
    %c16_i32 = arith.constant 16 : i32
    %21 = tpu.dynamic_rotate %6 by %c16_i32 dim 1 : vector<4x512xf32>, i32 -> vector<4x512xf32>
    %22 = vector.extract_strided_slice %7 {offsets = [1, 0], sizes = [1, 512], strides = [1, 1]} : vector<9x512xf32> to vector<1x512xf32>
    %23 = vector.broadcast %22 : vector<1x512xf32> to vector<4x512xf32>
    %24 = arith.mulf %21, %23 : vector<4x512xf32>
    %c4 = arith.constant 4 : index
    %c0_23 = arith.constant 0 : index
    %25 = vector.load %arg14[%c4, %c0_23] : memref<72x512xf32, #tpu.memory_space<vmem>>, vector<4x512xf32>
    tpu.vector_store %arg14[%c4, %c0_23], %24 {strides = array<i32>} : memref<72x512xf32, #tpu.memory_space<vmem>>, vector<4x512xf32>,
    %c15_i32 = arith.constant 15 : i32
    %26 = tpu.dynamic_rotate %6 by %c15_i32 dim 1 : vector<4x512xf32>, i32 -> vector<4x512xf32>
    %27 = vector.extract_strided_slice %7 {offsets = [2, 0], sizes = [1, 512], strides = [1, 1]} : vector<9x512xf32> to vector<1x512xf32>
    %28 = vector.broadcast %27 : vector<1x512xf32> to vector<4x512xf32>
    %29 = arith.mulf %26, %28 : vector<4x512xf32>
    %c8 = arith.constant 8 : index
    %c0_24 = arith.constant 0 : index
    %30 = vector.load %arg14[%c8, %c0_24] : memref<72x512xf32, #tpu.memory_space<vmem>>, vector<4x512xf32>
    tpu.vector_store %arg14[%c8, %c0_24], %29 {strides = array<i32>} : memref<72x512xf32, #tpu.memory_space<vmem>>, vector<4x512xf32>,
    %c1_i32 = arith.constant 1 : i32
    %31 = tpu.dynamic_rotate %6 by %c1_i32 dim 1 : vector<4x512xf32>, i32 -> vector<4x512xf32>
    %32 = vector.extract_strided_slice %7 {offsets = [3, 0], sizes = [1, 512], strides = [1, 1]} : vector<9x512xf32> to vector<1x512xf32>
    %33 = vector.broadcast %32 : vector<1x512xf32> to vector<4x512xf32>
    %34 = arith.mulf %31, %33 : vector<4x512xf32>
    %c12 = arith.constant 12 : index
    %c0_25 = arith.constant 0 : index
    %35 = vector.load %arg14[%c12, %c0_25] : memref<72x512xf32, #tpu.memory_space<vmem>>, vector<4x512xf32>
    tpu.vector_store %arg14[%c12, %c0_25], %34 {strides = array<i32>} : memref<72x512xf32, #tpu.memory_space<vmem>>, vector<4x512xf32>,
    %c16 = arith.constant 16 : index
    %c0_26 = arith.constant 0 : index
    %36 = vector.load %arg14[%c16, %c0_26] : memref<72x512xf32, #tpu.memory_space<vmem>>, vector<4x512xf32>
    tpu.vector_store %arg14[%c16, %c0_26], %6 {strides = array<i32>} : memref<72x512xf32, #tpu.memory_space<vmem>>, vector<4x512xf32>,
    %c511_i32 = arith.constant 511 : i32
    %37 = tpu.dynamic_rotate %6 by %c511_i32 dim 1 : vector<4x512xf32>, i32 -> vector<4x512xf32>
    %38 = vector.extract_strided_slice %7 {offsets = [5, 0], sizes = [1, 512], strides = [1, 1]} : vector<9x512xf32> to vector<1x512xf32>
    %39 = vector.broadcast %38 : vector<1x512xf32> to vector<4x512xf32>
    %40 = arith.mulf %37, %39 : vector<4x512xf32>
    %c20 = arith.constant 20 : index
    %c0_27 = arith.constant 0 : index
    %41 = vector.load %arg14[%c20, %c0_27] : memref<72x512xf32, #tpu.memory_space<vmem>>, vector<4x512xf32>
    tpu.vector_store %arg14[%c20, %c0_27], %40 {strides = array<i32>} : memref<72x512xf32, #tpu.memory_space<vmem>>, vector<4x512xf32>,
    %c497_i32 = arith.constant 497 : i32
    %42 = tpu.dynamic_rotate %6 by %c497_i32 dim 1 : vector<4x512xf32>, i32 -> vector<4x512xf32>
    %43 = vector.extract_strided_slice %7 {offsets = [6, 0], sizes = [1, 512], strides = [1, 1]} : vector<9x512xf32> to vector<1x512xf32>
    %44 = vector.broadcast %43 : vector<1x512xf32> to vector<4x512xf32>
    %45 = arith.mulf %42, %44 : vector<4x512xf32>
    %c24 = arith.constant 24 : index
    %c0_28 = arith.constant 0 : index
    %46 = vector.load %arg14[%c24, %c0_28] : memref<72x512xf32, #tpu.memory_space<vmem>>, vector<4x512xf32>
    tpu.vector_store %arg14[%c24, %c0_28], %45 {strides = array<i32>} : memref<72x512xf32, #tpu.memory_space<vmem>>, vector<4x512xf32>,
    %c496_i32 = arith.constant 496 : i32
    %47 = tpu.dynamic_rotate %6 by %c496_i32 dim 1 : vector<4x512xf32>, i32 -> vector<4x512xf32>
    %48 = vector.extract_strided_slice %7 {offsets = [7, 0], sizes = [1, 512], strides = [1, 1]} : vector<9x512xf32> to vector<1x512xf32>
    %49 = vector.broadcast %48 : vector<1x512xf32> to vector<4x512xf32>
    %50 = arith.mulf %47, %49 : vector<4x512xf32>
    %c28 = arith.constant 28 : index
    %c0_29 = arith.constant 0 : index
    %51 = vector.load %arg14[%c28, %c0_29] : memref<72x512xf32, #tpu.memory_space<vmem>>, vector<4x512xf32>
    tpu.vector_store %arg14[%c28, %c0_29], %50 {strides = array<i32>} : memref<72x512xf32, #tpu.memory_space<vmem>>, vector<4x512xf32>,
    %c495_i32 = arith.constant 495 : i32
    %52 = tpu.dynamic_rotate %6 by %c495_i32 dim 1 : vector<4x512xf32>, i32 -> vector<4x512xf32>
    %53 = vector.extract_strided_slice %7 {offsets = [8, 0], sizes = [1, 512], strides = [1, 1]} : vector<9x512xf32> to vector<1x512xf32>
    %54 = vector.broadcast %53 : vector<1x512xf32> to vector<4x512xf32>
    %55 = arith.mulf %52, %54 : vector<4x512xf32>
    %c32 = arith.constant 32 : index
    %c0_30 = arith.constant 0 : index
    %56 = vector.load %arg14[%c32, %c0_30] : memref<72x512xf32, #tpu.memory_space<vmem>>, vector<4x512xf32>
    tpu.vector_store %arg14[%c32, %c0_30], %55 {strides = array<i32>} : memref<72x512xf32, #tpu.memory_space<vmem>>, vector<4x512xf32>,
    %c0_31 = arith.constant 0 : index
    %c0_32 = arith.constant 0 : index
    %57 = vector.load %arg14[%c0_31, %c0_32] : memref<72x512xf32, #tpu.memory_space<vmem>>, vector<36x512xf32>
    %cst_33 = arith.constant dense<0.000000e+00> : vector<8x512xf32>
    %58 = tpu.matmul %14, %57, %cst_33 {dimension_numbers = #tpu.dot_dimension_numbers<[1], [0], [0], [1], [0, 0, 1, 1], [], []>} : vector<8x36xf32>, vector<36x512xf32>, vector<8x512xf32> -> vector<8x512xf32>
    %59 = vector.broadcast %15 : vector<8x1xf32> to vector<8x512xf32>
    %60 = arith.addf %58, %59 : vector<8x512xf32>
    %cst_34 = arith.constant 0.000000e+00 : f32
    %61 = vector.broadcast %cst_34 : f32 to vector<8x512xf32>
    %62 = arith.maximumf %60, %61 : vector<8x512xf32>
    %c0_35 = arith.constant 0 : index
    %c0_36 = arith.constant 0 : index
    %63 = vector.load %arg6[%c0_35, %c0_36] : memref<8x72xf32, #tpu.memory_space<vmem>>, vector<8x72xf32>
    %c0_37 = arith.constant 0 : index
    %c0_38 = arith.constant 0 : index
    %64 = vector.load %arg7[%c0_37, %c0_38] : memref<8x1xf32, #tpu.memory_space<vmem>>, vector<8x1xf32>
    %c34_i32 = arith.constant 34 : i32
    %65 = tpu.dynamic_rotate %62 by %c34_i32 dim 1 : vector<8x512xf32>, i32 -> vector<8x512xf32>
    %66 = vector.extract_strided_slice %8 {offsets = [0, 0], sizes = [1, 512], strides = [1, 1]} : vector<9x512xf32> to vector<1x512xf32>
    %67 = vector.broadcast %66 : vector<1x512xf32> to vector<8x512xf32>
    %68 = arith.mulf %65, %67 : vector<8x512xf32>
    %c0_39 = arith.constant 0 : index
    %c0_40 = arith.constant 0 : index
    %69 = vector.load %arg14[%c0_39, %c0_40] : memref<72x512xf32, #tpu.memory_space<vmem>>, vector<8x512xf32>
    tpu.vector_store %arg14[%c0_39, %c0_40], %68 {strides = array<i32>} : memref<72x512xf32, #tpu.memory_space<vmem>>, vector<8x512xf32>,
    %c32_i32 = arith.constant 32 : i32
    %70 = tpu.dynamic_rotate %62 by %c32_i32 dim 1 : vector<8x512xf32>, i32 -> vector<8x512xf32>
    %71 = vector.extract_strided_slice %8 {offsets = [1, 0], sizes = [1, 512], strides = [1, 1]} : vector<9x512xf32> to vector<1x512xf32>
    %72 = vector.broadcast %71 : vector<1x512xf32> to vector<8x512xf32>
    %73 = arith.mulf %70, %72 : vector<8x512xf32>
    %c8_41 = arith.constant 8 : index
    %c0_42 = arith.constant 0 : index
    %74 = vector.load %arg14[%c8_41, %c0_42] : memref<72x512xf32, #tpu.memory_space<vmem>>, vector<8x512xf32>
    tpu.vector_store %arg14[%c8_41, %c0_42], %73 {strides = array<i32>} : memref<72x512xf32, #tpu.memory_space<vmem>>, vector<8x512xf32>,
    %c30_i32 = arith.constant 30 : i32
    %75 = tpu.dynamic_rotate %62 by %c30_i32 dim 1 : vector<8x512xf32>, i32 -> vector<8x512xf32>
    %76 = vector.extract_strided_slice %8 {offsets = [2, 0], sizes = [1, 512], strides = [1, 1]} : vector<9x512xf32> to vector<1x512xf32>
    %77 = vector.broadcast %76 : vector<1x512xf32> to vector<8x512xf32>
    %78 = arith.mulf %75, %77 : vector<8x512xf32>
    %c16_43 = arith.constant 16 : index
    %c0_44 = arith.constant 0 : index
    %79 = vector.load %arg14[%c16_43, %c0_44] : memref<72x512xf32, #tpu.memory_space<vmem>>, vector<8x512xf32>
    tpu.vector_store %arg14[%c16_43, %c0_44], %78 {strides = array<i32>} : memref<72x512xf32, #tpu.memory_space<vmem>>, vector<8x512xf32>,
    %c2_i32 = arith.constant 2 : i32
    %80 = tpu.dynamic_rotate %62 by %c2_i32 dim 1 : vector<8x512xf32>, i32 -> vector<8x512xf32>
    %81 = vector.extract_strided_slice %8 {offsets = [3, 0], sizes = [1, 512], strides = [1, 1]} : vector<9x512xf32> to vector<1x512xf32>
    %82 = vector.broadcast %81 : vector<1x512xf32> to vector<8x512xf32>
    %83 = arith.mulf %80, %82 : vector<8x512xf32>
    %c24_45 = arith.constant 24 : index
    %c0_46 = arith.constant 0 : index
    %84 = vector.load %arg14[%c24_45, %c0_46] : memref<72x512xf32, #tpu.memory_space<vmem>>, vector<8x512xf32>
    tpu.vector_store %arg14[%c24_45, %c0_46], %83 {strides = array<i32>} : memref<72x512xf32, #tpu.memory_space<vmem>>, vector<8x512xf32>,
    %c32_47 = arith.constant 32 : index
    %c0_48 = arith.constant 0 : index
    %85 = vector.load %arg14[%c32_47, %c0_48] : memref<72x512xf32, #tpu.memory_space<vmem>>, vector<8x512xf32>
    tpu.vector_store %arg14[%c32_47, %c0_48], %62 {strides = array<i32>} : memref<72x512xf32, #tpu.memory_space<vmem>>, vector<8x512xf32>,
    %c510_i32 = arith.constant 510 : i32
    %86 = tpu.dynamic_rotate %62 by %c510_i32 dim 1 : vector<8x512xf32>, i32 -> vector<8x512xf32>
    %87 = vector.extract_strided_slice %8 {offsets = [5, 0], sizes = [1, 512], strides = [1, 1]} : vector<9x512xf32> to vector<1x512xf32>
    %88 = vector.broadcast %87 : vector<1x512xf32> to vector<8x512xf32>
    %89 = arith.mulf %86, %88 : vector<8x512xf32>
    %c40 = arith.constant 40 : index
    %c0_49 = arith.constant 0 : index
    %90 = vector.load %arg14[%c40, %c0_49] : memref<72x512xf32, #tpu.memory_space<vmem>>, vector<8x512xf32>
    tpu.vector_store %arg14[%c40, %c0_49], %89 {strides = array<i32>} : memref<72x512xf32, #tpu.memory_space<vmem>>, vector<8x512xf32>,
    %c482_i32 = arith.constant 482 : i32
    %91 = tpu.dynamic_rotate %62 by %c482_i32 dim 1 : vector<8x512xf32>, i32 -> vector<8x512xf32>
    %92 = vector.extract_strided_slice %8 {offsets = [6, 0], sizes = [1, 512], strides = [1, 1]} : vector<9x512xf32> to vector<1x512xf32>
    %93 = vector.broadcast %92 : vector<1x512xf32> to vector<8x512xf32>
    %94 = arith.mulf %91, %93 : vector<8x512xf32>
    %c48 = arith.constant 48 : index
    %c0_50 = arith.constant 0 : index
    %95 = vector.load %arg14[%c48, %c0_50] : memref<72x512xf32, #tpu.memory_space<vmem>>, vector<8x512xf32>
    tpu.vector_store %arg14[%c48, %c0_50], %94 {strides = array<i32>} : memref<72x512xf32, #tpu.memory_space<vmem>>, vector<8x512xf32>,
    %c480_i32 = arith.constant 480 : i32
    %96 = tpu.dynamic_rotate %62 by %c480_i32 dim 1 : vector<8x512xf32>, i32 -> vector<8x512xf32>
    %97 = vector.extract_strided_slice %8 {offsets = [7, 0], sizes = [1, 512], strides = [1, 1]} : vector<9x512xf32> to vector<1x512xf32>
    %98 = vector.broadcast %97 : vector<1x512xf32> to vector<8x512xf32>
    %99 = arith.mulf %96, %98 : vector<8x512xf32>
    %c56 = arith.constant 56 : index
    %c0_51 = arith.constant 0 : index
    %100 = vector.load %arg14[%c56, %c0_51] : memref<72x512xf32, #tpu.memory_space<vmem>>, vector<8x512xf32>
    tpu.vector_store %arg14[%c56, %c0_51], %99 {strides = array<i32>} : memref<72x512xf32, #tpu.memory_space<vmem>>, vector<8x512xf32>,
    %c478_i32 = arith.constant 478 : i32
    %101 = tpu.dynamic_rotate %62 by %c478_i32 dim 1 : vector<8x512xf32>, i32 -> vector<8x512xf32>
    %102 = vector.extract_strided_slice %8 {offsets = [8, 0], sizes = [1, 512], strides = [1, 1]} : vector<9x512xf32> to vector<1x512xf32>
    %103 = vector.broadcast %102 : vector<1x512xf32> to vector<8x512xf32>
    %104 = arith.mulf %101, %103 : vector<8x512xf32>
    %c64 = arith.constant 64 : index
    %c0_52 = arith.constant 0 : index
    %105 = vector.load %arg14[%c64, %c0_52] : memref<72x512xf32, #tpu.memory_space<vmem>>, vector<8x512xf32>
    tpu.vector_store %arg14[%c64, %c0_52], %104 {strides = array<i32>} : memref<72x512xf32, #tpu.memory_space<vmem>>, vector<8x512xf32>,
    %c0_53 = arith.constant 0 : index
    %c0_54 = arith.constant 0 : index
    %106 = vector.load %arg14[%c0_53, %c0_54] : memref<72x512xf32, #tpu.memory_space<vmem>>, vector<72x512xf32>
    %cst_55 = arith.constant dense<0.000000e+00> : vector<8x512xf32>
    %107 = tpu.matmul %63, %106, %cst_55 {dimension_numbers = #tpu.dot_dimension_numbers<[1], [0], [0], [1], [0, 0, 1, 1], [], []>} : vector<8x72xf32>, vector<72x512xf32>, vector<8x512xf32> -> vector<8x512xf32>
    %108 = vector.broadcast %64 : vector<8x1xf32> to vector<8x512xf32>
    %109 = arith.addf %107, %108 : vector<8x512xf32>
    %cst_56 = arith.constant 0.000000e+00 : f32
    %110 = vector.broadcast %cst_56 : f32 to vector<8x512xf32>
    %111 = arith.maximumf %109, %110 : vector<8x512xf32>
    %c0_57 = arith.constant 0 : index
    %c0_58 = arith.constant 0 : index
    %112 = vector.load %arg8[%c0_57, %c0_58] : memref<8x72xf32, #tpu.memory_space<vmem>>, vector<8x72xf32>
    %c0_59 = arith.constant 0 : index
    %c0_60 = arith.constant 0 : index
    %113 = vector.load %arg9[%c0_59, %c0_60] : memref<8x1xf32, #tpu.memory_space<vmem>>, vector<8x1xf32>
    %c17_i32_61 = arith.constant 17 : i32
    %114 = tpu.dynamic_rotate %111 by %c17_i32_61 dim 1 : vector<8x512xf32>, i32 -> vector<8x512xf32>
    %115 = vector.extract_strided_slice %7 {offsets = [0, 0], sizes = [1, 512], strides = [1, 1]} : vector<9x512xf32> to vector<1x512xf32>
    %116 = vector.broadcast %115 : vector<1x512xf32> to vector<8x512xf32>
    %117 = arith.mulf %114, %116 : vector<8x512xf32>
    %c0_62 = arith.constant 0 : index
    %c0_63 = arith.constant 0 : index
    %118 = vector.load %arg14[%c0_62, %c0_63] : memref<72x512xf32, #tpu.memory_space<vmem>>, vector<8x512xf32>
    tpu.vector_store %arg14[%c0_62, %c0_63], %117 {strides = array<i32>} : memref<72x512xf32, #tpu.memory_space<vmem>>, vector<8x512xf32>,
    %c16_i32_64 = arith.constant 16 : i32
    %119 = tpu.dynamic_rotate %111 by %c16_i32_64 dim 1 : vector<8x512xf32>, i32 -> vector<8x512xf32>
    %120 = vector.extract_strided_slice %7 {offsets = [1, 0], sizes = [1, 512], strides = [1, 1]} : vector<9x512xf32> to vector<1x512xf32>
    %121 = vector.broadcast %120 : vector<1x512xf32> to vector<8x512xf32>
    %122 = arith.mulf %119, %121 : vector<8x512xf32>
    %c8_65 = arith.constant 8 : index
    %c0_66 = arith.constant 0 : index
    %123 = vector.load %arg14[%c8_65, %c0_66] : memref<72x512xf32, #tpu.memory_space<vmem>>, vector<8x512xf32>
    tpu.vector_store %arg14[%c8_65, %c0_66], %122 {strides = array<i32>} : memref<72x512xf32, #tpu.memory_space<vmem>>, vector<8x512xf32>,
    %c15_i32_67 = arith.constant 15 : i32
    %124 = tpu.dynamic_rotate %111 by %c15_i32_67 dim 1 : vector<8x512xf32>, i32 -> vector<8x512xf32>
    %125 = vector.extract_strided_slice %7 {offsets = [2, 0], sizes = [1, 512], strides = [1, 1]} : vector<9x512xf32> to vector<1x512xf32>
    %126 = vector.broadcast %125 : vector<1x512xf32> to vector<8x512xf32>
    %127 = arith.mulf %124, %126 : vector<8x512xf32>
    %c16_68 = arith.constant 16 : index
    %c0_69 = arith.constant 0 : index
    %128 = vector.load %arg14[%c16_68, %c0_69] : memref<72x512xf32, #tpu.memory_space<vmem>>, vector<8x512xf32>
    tpu.vector_store %arg14[%c16_68, %c0_69], %127 {strides = array<i32>} : memref<72x512xf32, #tpu.memory_space<vmem>>, vector<8x512xf32>,
    %c1_i32_70 = arith.constant 1 : i32
    %129 = tpu.dynamic_rotate %111 by %c1_i32_70 dim 1 : vector<8x512xf32>, i32 -> vector<8x512xf32>
    %130 = vector.extract_strided_slice %7 {offsets = [3, 0], sizes = [1, 512], strides = [1, 1]} : vector<9x512xf32> to vector<1x512xf32>
    %131 = vector.broadcast %130 : vector<1x512xf32> to vector<8x512xf32>
    %132 = arith.mulf %129, %131 : vector<8x512xf32>
    %c24_71 = arith.constant 24 : index
    %c0_72 = arith.constant 0 : index
    %133 = vector.load %arg14[%c24_71, %c0_72] : memref<72x512xf32, #tpu.memory_space<vmem>>, vector<8x512xf32>
    tpu.vector_store %arg14[%c24_71, %c0_72], %132 {strides = array<i32>} : memref<72x512xf32, #tpu.memory_space<vmem>>, vector<8x512xf32>,
    %c32_73 = arith.constant 32 : index
    %c0_74 = arith.constant 0 : index
    %134 = vector.load %arg14[%c32_73, %c0_74] : memref<72x512xf32, #tpu.memory_space<vmem>>, vector<8x512xf32>
    tpu.vector_store %arg14[%c32_73, %c0_74], %111 {strides = array<i32>} : memref<72x512xf32, #tpu.memory_space<vmem>>, vector<8x512xf32>,
    %c511_i32_75 = arith.constant 511 : i32
    %135 = tpu.dynamic_rotate %111 by %c511_i32_75 dim 1 : vector<8x512xf32>, i32 -> vector<8x512xf32>
    %136 = vector.extract_strided_slice %7 {offsets = [5, 0], sizes = [1, 512], strides = [1, 1]} : vector<9x512xf32> to vector<1x512xf32>
    %137 = vector.broadcast %136 : vector<1x512xf32> to vector<8x512xf32>
    %138 = arith.mulf %135, %137 : vector<8x512xf32>
    %c40_76 = arith.constant 40 : index
    %c0_77 = arith.constant 0 : index
    %139 = vector.load %arg14[%c40_76, %c0_77] : memref<72x512xf32, #tpu.memory_space<vmem>>, vector<8x512xf32>
    tpu.vector_store %arg14[%c40_76, %c0_77], %138 {strides = array<i32>} : memref<72x512xf32, #tpu.memory_space<vmem>>, vector<8x512xf32>,
    %c497_i32_78 = arith.constant 497 : i32
    %140 = tpu.dynamic_rotate %111 by %c497_i32_78 dim 1 : vector<8x512xf32>, i32 -> vector<8x512xf32>
    %141 = vector.extract_strided_slice %7 {offsets = [6, 0], sizes = [1, 512], strides = [1, 1]} : vector<9x512xf32> to vector<1x512xf32>
    %142 = vector.broadcast %141 : vector<1x512xf32> to vector<8x512xf32>
    %143 = arith.mulf %140, %142 : vector<8x512xf32>
    %c48_79 = arith.constant 48 : index
    %c0_80 = arith.constant 0 : index
    %144 = vector.load %arg14[%c48_79, %c0_80] : memref<72x512xf32, #tpu.memory_space<vmem>>, vector<8x512xf32>
    tpu.vector_store %arg14[%c48_79, %c0_80], %143 {strides = array<i32>} : memref<72x512xf32, #tpu.memory_space<vmem>>, vector<8x512xf32>,
    %c496_i32_81 = arith.constant 496 : i32
    %145 = tpu.dynamic_rotate %111 by %c496_i32_81 dim 1 : vector<8x512xf32>, i32 -> vector<8x512xf32>
    %146 = vector.extract_strided_slice %7 {offsets = [7, 0], sizes = [1, 512], strides = [1, 1]} : vector<9x512xf32> to vector<1x512xf32>
    %147 = vector.broadcast %146 : vector<1x512xf32> to vector<8x512xf32>
    %148 = arith.mulf %145, %147 : vector<8x512xf32>
    %c56_82 = arith.constant 56 : index
    %c0_83 = arith.constant 0 : index
    %149 = vector.load %arg14[%c56_82, %c0_83] : memref<72x512xf32, #tpu.memory_space<vmem>>, vector<8x512xf32>
    tpu.vector_store %arg14[%c56_82, %c0_83], %148 {strides = array<i32>} : memref<72x512xf32, #tpu.memory_space<vmem>>, vector<8x512xf32>,
    %c495_i32_84 = arith.constant 495 : i32
    %150 = tpu.dynamic_rotate %111 by %c495_i32_84 dim 1 : vector<8x512xf32>, i32 -> vector<8x512xf32>
    %151 = vector.extract_strided_slice %7 {offsets = [8, 0], sizes = [1, 512], strides = [1, 1]} : vector<9x512xf32> to vector<1x512xf32>
    %152 = vector.broadcast %151 : vector<1x512xf32> to vector<8x512xf32>
    %153 = arith.mulf %150, %152 : vector<8x512xf32>
    %c64_85 = arith.constant 64 : index
    %c0_86 = arith.constant 0 : index
    %154 = vector.load %arg14[%c64_85, %c0_86] : memref<72x512xf32, #tpu.memory_space<vmem>>, vector<8x512xf32>
    tpu.vector_store %arg14[%c64_85, %c0_86], %153 {strides = array<i32>} : memref<72x512xf32, #tpu.memory_space<vmem>>, vector<8x512xf32>,
    %c0_87 = arith.constant 0 : index
    %c0_88 = arith.constant 0 : index
    %155 = vector.load %arg14[%c0_87, %c0_88] : memref<72x512xf32, #tpu.memory_space<vmem>>, vector<72x512xf32>
    %cst_89 = arith.constant dense<0.000000e+00> : vector<8x512xf32>
    %156 = tpu.matmul %112, %155, %cst_89 {dimension_numbers = #tpu.dot_dimension_numbers<[1], [0], [0], [1], [0, 0, 1, 1], [], []>} : vector<8x72xf32>, vector<72x512xf32>, vector<8x512xf32> -> vector<8x512xf32>
    %157 = vector.broadcast %113 : vector<8x1xf32> to vector<8x512xf32>
    %158 = arith.addf %156, %157 : vector<8x512xf32>
    %159 = arith.addf %158, %13 : vector<8x512xf32>
    %cst_90 = arith.constant 0.000000e+00 : f32
    %160 = vector.broadcast %cst_90 : f32 to vector<8x512xf32>
    %161 = arith.maximumf %159, %160 : vector<8x512xf32>
    %162 = vector.extract_strided_slice %161 {offsets = [0, 0], sizes = [8, 256], strides = [1, 1]} : vector<8x512xf32> to vector<8x256xf32>
    %c0_91 = arith.constant 0 : index
    %c0_92 = arith.constant 0 : index
    %c0_93 = arith.constant 0 : index
    %163 = vector.load %arg12[%c0_91, %c0_92, %c0_93] : memref<2x8x256xf32, #tpu.memory_space<vmem>>, vector<1x8x256xf32>
    %164 = vector.shape_cast %163 : vector<1x8x256xf32> to vector<8x256xf32>
    %165 = vector.shape_cast %162 : vector<8x256xf32> to vector<1x8x256xf32>
    tpu.vector_store %arg12[%c0_91, %c0_92, %c0_93], %165 {strides = array<i32>} : memref<2x8x256xf32, #tpu.memory_space<vmem>>, vector<1x8x256xf32>,
    %166 = vector.extract_strided_slice %161 {offsets = [0, 256], sizes = [8, 256], strides = [1, 1]} : vector<8x512xf32> to vector<8x256xf32>
    %c1_94 = arith.constant 1 : index
    %c0_95 = arith.constant 0 : index
    %c0_96 = arith.constant 0 : index
    %167 = vector.load %arg12[%c1_94, %c0_95, %c0_96] : memref<2x8x256xf32, #tpu.memory_space<vmem>>, vector<1x8x256xf32>
    %168 = vector.shape_cast %167 : vector<1x8x256xf32> to vector<8x256xf32>
    %169 = vector.shape_cast %166 : vector<8x256xf32> to vector<1x8x256xf32>
    tpu.vector_store %arg12[%c1_94, %c0_95, %c0_96], %169 {strides = array<i32>} : memref<2x8x256xf32, #tpu.memory_space<vmem>>, vector<1x8x256xf32>,
    return
  }
  func.func @transform_0(%arg0: i32) -> (i32, i32, i32) {
    %c0_i32 = arith.constant 0 : i32
    %c0_i32_0 = arith.constant 0 : i32
    %c0_i32_1 = arith.constant 0 : i32
    return %arg0, %c0_i32, %c0_i32_0 : i32, i32, i32
  }
  func.func @transform_1(%arg0: i32) -> (i32, i32) {
    %c0_i32 = arith.constant 0 : i32
    %c0_i32_0 = arith.constant 0 : i32
    %c0_i32_1 = arith.constant 0 : i32
    return %c0_i32, %c0_i32_0 : i32, i32
  }
  func.func @transform_2(%arg0: i32) -> (i32, i32) {
    %c0_i32 = arith.constant 0 : i32
    %c0_i32_0 = arith.constant 0 : i32
    %c0_i32_1 = arith.constant 0 : i32
    return %c0_i32, %c0_i32_0 : i32, i32
  }
  func.func @transform_3(%arg0: i32) -> (i32, i32) {
    %c0_i32 = arith.constant 0 : i32
    %c0_i32_0 = arith.constant 0 : i32
    %c0_i32_1 = arith.constant 0 : i32
    return %c0_i32, %c0_i32_0 : i32, i32
  }
  func.func @transform_4(%arg0: i32) -> (i32, i32) {
    %c0_i32 = arith.constant 0 : i32
    %c0_i32_0 = arith.constant 0 : i32
    %c0_i32_1 = arith.constant 0 : i32
    return %c0_i32, %c0_i32_0 : i32, i32
  }
  func.func @transform_5(%arg0: i32) -> (i32, i32) {
    %c0_i32 = arith.constant 0 : i32
    %c0_i32_0 = arith.constant 0 : i32
    %c0_i32_1 = arith.constant 0 : i32
    return %c0_i32, %c0_i32_0 : i32, i32
  }
  func.func @transform_6(%arg0: i32) -> (i32, i32) {
    %c0_i32 = arith.constant 0 : i32
    %c0_i32_0 = arith.constant 0 : i32
    %c0_i32_1 = arith.constant 0 : i32
    return %c0_i32, %c0_i32_0 : i32, i32
  }
  func.func @transform_7(%arg0: i32) -> (i32, i32) {
    %c0_i32 = arith.constant 0 : i32
    %c0_i32_0 = arith.constant 0 : i32
    %c0_i32_1 = arith.constant 0 : i32
    return %c0_i32, %c0_i32_0 : i32, i32
  }
  func.func @transform_8(%arg0: i32) -> (i32, i32) {
    %c0_i32 = arith.constant 0 : i32
    %c0_i32_0 = arith.constant 0 : i32
    %c0_i32_1 = arith.constant 0 : i32
    return %c0_i32, %c0_i32_0 : i32, i32
  }
  func.func @transform_9(%arg0: i32) -> (i32, i32) {
    %c0_i32 = arith.constant 0 : i32
    %c0_i32_0 = arith.constant 0 : i32
    %c0_i32_1 = arith.constant 0 : i32
    return %c0_i32, %c0_i32_0 : i32, i32
  }
  func.func @transform_10(%arg0: i32) -> (i32, i32) {
    %c0_i32 = arith.constant 0 : i32
    %c0_i32_0 = arith.constant 0 : i32
    %c0_i32_1 = arith.constant 0 : i32
    return %c0_i32, %c0_i32_0 : i32, i32
  }
  func.func @transform_11(%arg0: i32) -> (i32, i32, i32) {
    %c0_i32 = arith.constant 0 : i32
    %c0_i32_0 = arith.constant 0 : i32
    %c0_i32_1 = arith.constant 0 : i32
    return %arg0, %c0_i32, %c0_i32_0 : i32, i32, i32
  }
}

</mosaic_0001>

<llo_original>
// kernel: color_residual_block.1
$region0: #{color_residual_block.1}
  #allocation0 [shape = 'u32[]', space=smem, size = 0x4, offset = 0x4, fixed_abs, tag = 'smem constant byte address 0x4 - core index']
  #allocation1 [shape = 'u32[72,128]{1,0:T(1,128)}', space=vmem, size = 0x9000, scoped, tag = 'internal scratch']
  #allocation2 [shape = 'f32[4,512]{1,0:T(4,128)}', space=vmem, size = 0x2000, scoped, tag = 'scratch operand']
  #allocation3 [shape = 'f32[72,512]{1,0:T(8,128)}', space=vmem, size = 0x24000, scoped, tag = 'scratch operand']
  %s0 = inlined_call_operand.vmem [shape: f32[2,4,256], index: 0, kind: input, shape index: {}]
  %s1 = inlined_call_operand.vmem [shape: f32[9,512], index: 1, kind: input, shape index: {}]
  %s2 = inlined_call_operand.vmem [shape: f32[9,512], index: 2, kind: input, shape index: {}]
  %s3 = inlined_call_operand.vmem [shape: f32[8,36], index: 3, kind: input, shape index: {}]
  %s4 = inlined_call_operand.vmem [shape: f32[8,1], index: 4, kind: input, shape index: {}]
  %s5 = inlined_call_operand.vmem [shape: f32[8,72], index: 5, kind: input, shape index: {}]
  %s6 = inlined_call_operand.vmem [shape: f32[8,1], index: 6, kind: input, shape index: {}]
  %s7 = inlined_call_operand.vmem [shape: f32[8,72], index: 7, kind: input, shape index: {}]
  %s8 = inlined_call_operand.vmem [shape: f32[8,1], index: 8, kind: input, shape index: {}]
  %s9 = inlined_call_operand.vmem [shape: f32[8,4], index: 9, kind: input, shape index: {}]
  %s10 = inlined_call_operand.vmem [shape: f32[8,1], index: 10, kind: input, shape index: {}]
  %s11 = inlined_call_operand.vmem [shape: f32[2,8,256], index: 11, kind: output, shape index: {}]
  %s12 = sld [smem:[#allocation0]]
  $region54: #{color_residual_block.1} parent=0
    _
  %s14 = ssub.s32 1, %s12
  %s15 = scalar_select 0, %s14, %s12
  // Predicated region
  $region2: #{color_residual_block.1} parent=0 // pred_check
    _
  $region3: #{color_residual_block.1} parent=0 // pred_check_branch
    %17 = sbr.rel (0) target = $region5
  $region4: #{color_residual_block.1} parent=0 // pred_region
    _
  $region5: #{color_residual_block.1} parent=0 // pred_fallthru
    _
  // Predicated region
  $region6: #{color_residual_block.1} parent=0 // pred_check
    _
  $region7: #{color_residual_block.1} parent=0 // pred_check_branch
    %19 = sbr.rel (0) target = $region9
  $region8: #{color_residual_block.1} parent=0 // pred_region
    _
  $region9: #{color_residual_block.1} parent=0 // pred_fallthru
    _
  // Predicated region
  $region10: #{color_residual_block.1} parent=0 // pred_check
    _
  $region11: #{color_residual_block.1} parent=0 // pred_check_branch
    %21 = sbr.rel (0) target = $region13
  $region12: #{color_residual_block.1} parent=0 // pred_region
    _
  $region13: #{color_residual_block.1} parent=0 // pred_fallthru
    _
  // Predicated region
  $region14: #{color_residual_block.1} parent=0 // pred_check
    _
  $region15: #{color_residual_block.1} parent=0 // pred_check_branch
    %23 = sbr.rel (0) target = $region17
  $region16: #{color_residual_block.1} parent=0 // pred_region
    _
  $region17: #{color_residual_block.1} parent=0 // pred_fallthru
    _
  // Predicated region
  $region18: #{color_residual_block.1} parent=0 // pred_check
    _
  $region19: #{color_residual_block.1} parent=0 // pred_check_branch
    %25 = sbr.rel (0) target = $region21
  $region20: #{color_residual_block.1} parent=0 // pred_region
    _
  $region21: #{color_residual_block.1} parent=0 // pred_fallthru
    _
  // Predicated region
  $region22: #{color_residual_block.1} parent=0 // pred_check
    _
  $region23: #{color_residual_block.1} parent=0 // pred_check_branch
    %27 = sbr.rel (0) target = $region25
  $region24: #{color_residual_block.1} parent=0 // pred_region
    _
  $region25: #{color_residual_block.1} parent=0 // pred_fallthru
    _
  // Predicated region
  $region26: #{color_residual_block.1} parent=0 // pred_check
    _
  $region27: #{color_residual_block.1} parent=0 // pred_check_branch
    %29 = sbr.rel (0) target = $region29
  $region28: #{color_residual_block.1} parent=0 // pred_region
    _
  $region29: #{color_residual_block.1} parent=0 // pred_fallthru
    _
  // Predicated region
  $region30: #{color_residual_block.1} parent=0 // pred_check
    _
  $region31: #{color_residual_block.1} parent=0 // pred_check_branch
    %31 = sbr.rel (0) target = $region33
  $region32: #{color_residual_block.1} parent=0 // pred_region
    _
  $region33: #{color_residual_block.1} parent=0 // pred_fallthru
    _
  // Predicated region
  $region34: #{color_residual_block.1} parent=0 // pred_check
    _
  $region35: #{color_residual_block.1} parent=0 // pred_check_branch
    %33 = sbr.rel (0) target = $region37
  $region36: #{color_residual_block.1} parent=0 // pred_region
    _
  $region37: #{color_residual_block.1} parent=0 // pred_fallthru
    _
  // Predicated region
  $region38: #{color_residual_block.1} parent=0 // pred_check
    _
  $region39: #{color_residual_block.1} parent=0 // pred_check_branch
    %35 = sbr.rel (0) target = $region41
  $region40: #{color_residual_block.1} parent=0 // pred_region
    _
  $region41: #{color_residual_block.1} parent=0 // pred_fallthru
    _
  // Predicated region
  $region42: #{color_residual_block.1} parent=0 // pred_check
    _
  $region43: #{color_residual_block.1} parent=0 // pred_check_branch
    %37 = sbr.rel (0) target = $region45
  $region44: #{color_residual_block.1} parent=0 // pred_region
    _
  $region45: #{color_residual_block.1} parent=0 // pred_fallthru
    _
  %v38 = vld [vmem:[%s0] sm:$0xff]
  %39 = vst [vmem:[#allocation2] sm:$0xff] %v38
  %s40 = scalar_lea.vmem %s0, 8
  %v41 = vld [vmem:[%s40] sm:$0xff]
  %42 = vst [vmem:[#allocation2 + $0x8] sm:$0xff] %v41
  %v43 = vld [vmem:[#allocation2] sm:$0xff]
  %v44 = vld [vmem:[#allocation2 + $0x8] sm:$0xff]
  %v45 = vld [vmem:[%s1] sm:$0xff]
  %v46 = vld [vmem:[%s1 + $0x8] sm:$0xff]
  %v47 = vld [vmem:[%s1 + $0x10] sm:$0xff]
  %v48 = vld [vmem:[%s1 + $0x18] sm:$0xff]
  %v49 = vld [vmem:[%s1 + $0x20] sm:$0x1]
  %v50 = vld [vmem:[%s1 + $0x28] sm:$0x1]
  %v51 = vld [vmem:[%s1 + $0x30] sm:$0x1]
  %v52 = vld [vmem:[%s1 + $0x38] sm:$0x1]
  %v53 = vld [vmem:[%s2] sm:$0xff]
  %v54 = vld [vmem:[%s2 + $0x8] sm:$0xff]
  %v55 = vld [vmem:[%s2 + $0x10] sm:$0xff]
  %v56 = vld [vmem:[%s2 + $0x18] sm:$0xff]
  %v57 = vld [vmem:[%s2 + $0x20] sm:$0x1]
  %v58 = vld [vmem:[%s2 + $0x28] sm:$0x1]
  %v59 = vld [vmem:[%s2 + $0x30] sm:$0x1]
  %v60 = vld [vmem:[%s2 + $0x38] sm:$0x1]
  %v61 = vld [vmem:[%s9] sm:$0xff]
  %v62 = vld [vmem:[%s10] sm:$0xff]
  %64 = vset.pattern.permute.xlu0 0
  %65 = vperm.xlu0 %64, %v62
  %v66 = vpop.permute.xlu0 %65
  %70 = vst [vmem:[#allocation1] ss:$2 sm:$0xff] %v43
  %s71 = scalar_lea.vmem [#allocation1], 16
  %72 = vst [vmem:[%s71] ss:$2 sm:$0xff] %v44
  %v73 = vld.sshfl [vmem:[#allocation1] sm:$0xff pattern:$0x75316420]
  %v74 = vld.sshfl [vmem:[#allocation1 + $0x8] sm:$0xff pattern:$0x75316420]
  %v75 = vld.sshfl [vmem:[#allocation1 + $0x10] sm:$0xff pattern:$0x75316420]
  %v76 = vld.sshfl [vmem:[#allocation1 + $0x18] sm:$0xff pattern:$0x75316420]
  %vm77 = vcmask 31744
  %v79 = vsel %vm77, %v61, 0
  %vm81 = vcmask 1043456
  %v82 = vsel %vm81, %v73, 0
  %v84 = vsel %vm81, %v74, 0
  %v86 = vsel %vm81, %v75, 0
  %v88 = vsel %vm81, %v76, 0
  %90 = vmatpush.msra.mxu0 0.0
  %91 = vmatpush.msra.mxu0 0.0
  %92 = vmatpush.msra.mxu0 0.0
  %93 = vmatpush.msra.mxu0 0.0
  %94 = vmatpush.msra.mxu0 0.0
  %95 = vmatpush.msra.mxu0 0.0
  %96 = vmatpush.msra.mxu0 0.0
  %97 = vmatpush.msra.mxu0 0.0
  %98 = vmatpush.msra.mxu0 0.0
  %99 = vmatpush.msra.mxu0 0.0
  %100 = vmatpush.msra.mxu0 0.0
  %101 = vmatpush.msra.mxu0 0.0
  %102 = vmatpush.msra.mxu0 0.0
  %103 = vmatpush.msra.mxu0 0.0
  %104 = vmatpush.msra.mxu0 0.0
  %105 = vmatpush.msra.mxu0 %v82
  %106 = vmatmul.f32.gmra.mxu0 %v79
  %v107 = vpop.f32.mrf.mxu0
  %v108 = vadd.f32 %v66, %v107
  %109 = vdwg.mxu0
  %110 = vmatpush.msra.mxu0 0.0
  %111 = vmatpush.msra.mxu0 0.0
  %112 = vmatpush.msra.mxu0 0.0
  %113 = vmatpush.msra.mxu0 0.0
  %114 = vmatpush.msra.mxu0 0.0
  %115 = vmatpush.msra.mxu0 0.0
  %116 = vmatpush.msra.mxu0 0.0
  %117 = vmatpush.msra.mxu0 0.0
  %118 = vmatpush.msra.mxu0 0.0
  %119 = vmatpush.msra.mxu0 0.0
  %120 = vmatpush.msra.mxu0 0.0
  %121 = vmatpush.msra.mxu0 0.0
  %122 = vmatpush.msra.mxu0 0.0
  %123 = vmatpush.msra.mxu0 0.0
  %124 = vmatpush.msra.mxu0 0.0
  %125 = vmatpush.msra.mxu0 %v84
  %126 = vmatmul.f32.gmra.mxu0 %v79
  %v127 = vpop.f32.mrf.mxu0
  %v128 = vadd.f32 %v66, %v127
  %129 = vdwg.mxu0
  %130 = vmatpush.msra.mxu0 0.0
  %131 = vmatpush.msra.mxu0 0.0
  %132 = vmatpush.msra.mxu0 0.0
  %133 = vmatpush.msra.mxu0 0.0
  %134 = vmatpush.msra.mxu0 0.0
  %135 = vmatpush.msra.mxu0 0.0
  %136 = vmatpush.msra.mxu0 0.0
  %137 = vmatpush.msra.mxu0 0.0
  %138 = vmatpush.msra.mxu0 0.0
  %139 = vmatpush.msra.mxu0 0.0
  %140 = vmatpush.msra.mxu0 0.0
  %141 = vmatpush.msra.mxu0 0.0
  %142 = vmatpush.msra.mxu0 0.0
  %143 = vmatpush.msra.mxu0 0.0
  %144 = vmatpush.msra.mxu0 0.0
  %145 = vmatpush.msra.mxu0 %v86
  %146 = vmatmul.f32.gmra.mxu0 %v79
  %v147 = vpop.f32.mrf.mxu0
  %v148 = vadd.f32 %v66, %v147
  %149 = vdwg.mxu0
  %150 = vmatpush.msra.mxu0 0.0
  %151 = vmatpush.msra.mxu0 0.0
  %152 = vmatpush.msra.mxu0 0.0
  %153 = vmatpush.msra.mxu0 0.0
  %154 = vmatpush.msra.mxu0 0.0
  %155 = vmatpush.msra.mxu0 0.0
  %156 = vmatpush.msra.mxu0 0.0
  %157 = vmatpush.msra.mxu0 0.0
  %158 = vmatpush.msra.mxu0 0.0
  %159 = vmatpush.msra.mxu0 0.0
  %160 = vmatpush.msra.mxu0 0.0
  %161 = vmatpush.msra.mxu0 0.0
  %162 = vmatpush.msra.mxu0 0.0
  %163 = vmatpush.msra.mxu0 0.0
  %164 = vmatpush.msra.mxu0 0.0
  %165 = vmatpush.msra.mxu0 %v88
  %166 = vmatmul.f32.gmra.mxu0 %v79
  %v167 = vpop.f32.mrf.mxu0
  %v168 = vadd.f32 %v66, %v167
  %169 = vdwg.mxu0
  %v170 = vld [vmem:[%s3] sm:$0xff]
  %v171 = vld [vmem:[%s4] sm:$0xff]
  %172 = vst [vmem:[#allocation1] ss:$2 sm:$0xff] %v43
  %s173 = scalar_lea.vmem [#allocation1], 16
  %174 = vst [vmem:[%s173] ss:$2 sm:$0xff] %v44
  %v175 = vld.sshfl [vmem:[#allocation1] sm:$0xff pattern:$0x75316420]
  %v176 = vld.sshfl [vmem:[#allocation1 + $0x8] sm:$0xff pattern:$0x75316420]
  %v177 = vld.sshfl [vmem:[#allocation1 + $0x10] sm:$0xff pattern:$0x75316420]
  %v178 = vld.sshfl [vmem:[#allocation1 + $0x18] sm:$0xff pattern:$0x75316420]
  %183 = vrot.lane.b32.xlu0 %v175, 17
  %v184 = vpop.permute.xlu0 %183
  %185 = vrot.lane.b32.xlu0 %v176, 17
  %v186 = vpop.permute.xlu0 %185
  %187 = vrot.lane.b32.xlu0 %v177, 17
  %v188 = vpop.permute.xlu0 %187
  %189 = vrot.lane.b32.xlu0 %v178, 17
  %v190 = vpop.permute.xlu0 %189
  %v191 = vlaneseq
  %v192 = vand.u32 %v191, 127
  %vm193 = vcmp.lt.s32.totalorder %v192, 17
  %v194 = vsel %vm193, %v188, %v190
  %v195 = vsel %vm193, %v186, %v188
  %v196 = vsel %vm193, %v184, %v186
  %v197 = vsel %vm193, %v190, %v184
  %v198 = vperm.slane %v45, 0
  %v199 = vperm.slane %v46, 0
  %v200 = vperm.slane %v47, 0
  %v201 = vperm.slane %v48, 0
  %v202 = vmul.f32 %v197, %v198
  %v203 = vmul.f32 %v196, %v199
  %v204 = vmul.f32 %v195, %v200
  %v205 = vmul.f32 %v194, %v201
  %206 = vst [vmem:[#allocation3] sm:$0xf] %v202
  %207 = vst [vmem:[#allocation3 + $0x8] sm:$0xf] %v203
  %208 = vst [vmem:[#allocation3 + $0x10] sm:$0xf] %v204
  %209 = vst [vmem:[#allocation3 + $0x18] sm:$0xf] %v205
  %210 = vst [vmem:[#allocation1] ss:$2 sm:$0xff] %v43
  %s211 = scalar_lea.vmem [#allocation1], 16
  %212 = vst [vmem:[%s211] ss:$2 sm:$0xff] %v44
  %v213 = vld.sshfl [vmem:[#allocation1] sm:$0xff pattern:$0x75316420]
  %v214 = vld.sshfl [vmem:[#allocation1 + $0x8] sm:$0xff pattern:$0x75316420]
  %v215 = vld.sshfl [vmem:[#allocation1 + $0x10] sm:$0xff pattern:$0x75316420]
  %v216 = vld.sshfl [vmem:[#allocation1 + $0x18] sm:$0xff pattern:$0x75316420]
  %221 = vrot.lane.b32.xlu0 %v213, 16
  %v222 = vpop.permute.xlu0 %221
  %223 = vrot.lane.b32.xlu0 %v214, 16
  %v224 = vpop.permute.xlu0 %223
  %225 = vrot.lane.b32.xlu0 %v215, 16
  %v226 = vpop.permute.xlu0 %225
  %227 = vrot.lane.b32.xlu0 %v216, 16
  %v228 = vpop.permute.xlu0 %227
  %vm229 = vcmp.lt.s32.totalorder %v192, 16
  %v230 = vsel %vm229, %v226, %v228
  %v231 = vsel %vm229, %v224, %v226
  %v232 = vsel %vm229, %v222, %v224
  %v233 = vsel %vm229, %v228, %v222
  %v234 = vperm.slane %v45, 1
  %v235 = vperm.slane %v46, 1
  %v236 = vperm.slane %v47, 1
  %v237 = vperm.slane %v48, 1
  %v238 = vmul.f32 %v233, %v234
  %v239 = vmul.f32 %v232, %v235
  %v240 = vmul.f32 %v231, %v236
  %v241 = vmul.f32 %v230, %v237
  %v246 = vrot.slane %v238, 4
  %v247 = vrot.slane %v239, 4
  %v248 = vrot.slane %v240, 4
  %v249 = vrot.slane %v241, 4
  %254 = vst [vmem:[#allocation3] sm:$0xf0] %v246
  %255 = vst [vmem:[#allocation3 + $0x8] sm:$0xf0] %v247
  %256 = vst [vmem:[#allocation3 + $0x10] sm:$0xf0] %v248
  %257 = vst [vmem:[#allocation3 + $0x18] sm:$0xf0] %v249
  %258 = vst [vmem:[#allocation1] ss:$2 sm:$0xff] %v43
  %s259 = scalar_lea.vmem [#allocation1], 16
  %260 = vst [vmem:[%s259] ss:$2 sm:$0xff] %v44
  %v261 = vld.sshfl [vmem:[#allocation1] sm:$0xff pattern:$0x75316420]
  %v262 = vld.sshfl [vmem:[#allocation1 + $0x8] sm:$0xff pattern:$0x75316420]
  %v263 = vld.sshfl [vmem:[#allocation1 + $0x10] sm:$0xff pattern:$0x75316420]
  %v264 = vld.sshfl [vmem:[#allocation1 + $0x18] sm:$0xff pattern:$0x75316420]
  %269 = vrot.lane.b32.xlu0 %v261, 15
  %v270 = vpop.permute.xlu0 %269
  %271 = vrot.lane.b32.xlu0 %v262, 15
  %v272 = vpop.permute.xlu0 %271
  %273 = vrot.lane.b32.xlu0 %v263, 15
  %v274 = vpop.permute.xlu0 %273
  %275 = vrot.lane.b32.xlu0 %v264, 15
  %v276 = vpop.permute.xlu0 %275
  %vm277 = vcmp.lt.s32.totalorder %v192, 15
  %v278 = vsel %vm277, %v274, %v276
  %v279 = vsel %vm277, %v272, %v274
  %v280 = vsel %vm277, %v270, %v272
  %v281 = vsel %vm277, %v276, %v270
  %v282 = vperm.slane %v45, 2
  %v283 = vperm.slane %v46, 2
  %v284 = vperm.slane %v47, 2
  %v285 = vperm.slane %v48, 2
  %v286 = vmul.f32 %v281, %v282
  %v287 = vmul.f32 %v280, %v283
  %v288 = vmul.f32 %v279, %v284
  %v289 = vmul.f32 %v278, %v285
  %290 = vst [vmem:[#allocation3 + $0x20] sm:$0xf] %v286
  %291 = vst [vmem:[#allocation3 + $0x28] sm:$0xf] %v287
  %292 = vst [vmem:[#allocation3 + $0x30] sm:$0xf] %v288
  %293 = vst [vmem:[#allocation3 + $0x38] sm:$0xf] %v289
  %294 = vst [vmem:[#allocation1] ss:$2 sm:$0xff] %v43
  %s295 = scalar_lea.vmem [#allocation1], 16
  %296 = vst [vmem:[%s295] ss:$2 sm:$0xff] %v44
  %v297 = vld.sshfl [vmem:[#allocation1] sm:$0xff pattern:$0x75316420]
  %v298 = vld.sshfl [vmem:[#allocation1 + $0x8] sm:$0xff pattern:$0x75316420]
  %v299 = vld.sshfl [vmem:[#allocation1 + $0x10] sm:$0xff pattern:$0x75316420]
  %v300 = vld.sshfl [vmem:[#allocation1 + $0x18] sm:$0xff pattern:$0x75316420]
  %305 = vrot.lane.b32.xlu0 %v297, 1
  %v306 = vpop.permute.xlu0 %305
  %307 = vrot.lane.b32.xlu0 %v298, 1
  %v308 = vpop.permute.xlu0 %307
  %309 = vrot.lane.b32.xlu0 %v299, 1
  %v310 = vpop.permute.xlu0 %309
  %311 = vrot.lane.b32.xlu0 %v300, 1
  %v312 = vpop.permute.xlu0 %311
  %vm313 = vcmp.lt.s32.totalorder %v192, 1
  %v314 = vsel %vm313, %v310, %v312
  %v315 = vsel %vm313, %v308, %v310
  %v316 = vsel %vm313, %v306, %v308
  %v317 = vsel %vm313, %v312, %v306
  %v318 = vperm.slane %v45, 3
  %v319 = vperm.slane %v46, 3
  %v320 = vperm.slane %v47, 3
  %v321 = vperm.slane %v48, 3
  %v322 = vmul.f32 %v317, %v318
  %v323 = vmul.f32 %v316, %v319
  %v324 = vmul.f32 %v315, %v320
  %v325 = vmul.f32 %v314, %v321
  %v330 = vrot.slane %v322, 4
  %v331 = vrot.slane %v323, 4
  %v332 = vrot.slane %v324, 4
  %v333 = vrot.slane %v325, 4
  %338 = vst [vmem:[#allocation3 + $0x20] sm:$0xf0] %v330
  %339 = vst [vmem:[#allocation3 + $0x28] sm:$0xf0] %v331
  %340 = vst [vmem:[#allocation3 + $0x30] sm:$0xf0] %v332
  %341 = vst [vmem:[#allocation3 + $0x38] sm:$0xf0] %v333
  %342 = vst [vmem:[#allocation1] ss:$2 sm:$0xff] %v43
  %s343 = scalar_lea.vmem [#allocation1], 16
  %344 = vst [vmem:[%s343] ss:$2 sm:$0xff] %v44
  %v345 = vld.sshfl [vmem:[#allocation1] sm:$0xff pattern:$0x75316420]
  %v346 = vld.sshfl [vmem:[#allocation1 + $0x8] sm:$0xff pattern:$0x75316420]
  %v347 = vld.sshfl [vmem:[#allocation1 + $0x10] sm:$0xff pattern:$0x75316420]
  %v348 = vld.sshfl [vmem:[#allocation1 + $0x18] sm:$0xff pattern:$0x75316420]
  %353 = vst [vmem:[#allocation3 + $0x40] sm:$0xf] %v345
  %354 = vst [vmem:[#allocation3 + $0x48] sm:$0xf] %v346
  %355 = vst [vmem:[#allocation3 + $0x50] sm:$0xf] %v347
  %356 = vst [vmem:[#allocation3 + $0x58] sm:$0xf] %v348
  %357 = vst [vmem:[#allocation1] ss:$2 sm:$0xff] %v43
  %s358 = scalar_lea.vmem [#allocation1], 16
  %359 = vst [vmem:[%s358] ss:$2 sm:$0xff] %v44
  %v360 = vld.sshfl [vmem:[#allocation1] sm:$0xff pattern:$0x75316420]
  %v361 = vld.sshfl [vmem:[#allocation1 + $0x8] sm:$0xff pattern:$0x75316420]
  %v362 = vld.sshfl [vmem:[#allocation1 + $0x10] sm:$0xff pattern:$0x75316420]
  %v363 = vld.sshfl [vmem:[#allocation1 + $0x18] sm:$0xff pattern:$0x75316420]
  %368 = vrot.lane.b32.xlu0 %v360, 127
  %v369 = vpop.permute.xlu0 %368
  %370 = vrot.lane.b32.xlu0 %v361, 127
  %v371 = vpop.permute.xlu0 %370
  %372 = vrot.lane.b32.xlu0 %v362, 127
  %v373 = vpop.permute.xlu0 %372
  %374 = vrot.lane.b32.xlu0 %v363, 127
  %v375 = vpop.permute.xlu0 %374
  %vm376 = vcmp.lt.s32.totalorder %v192, 127
  %v377 = vsel %vm376, %v373, %v375
  %v378 = vsel %vm376, %v371, %v373
  %v379 = vsel %vm376, %v369, %v371
  %v380 = vsel %vm376, %v375, %v369
  %v381 = vperm.slane %v45, 5
  %v382 = vperm.slane %v46, 5
  %v383 = vperm.slane %v47, 5
  %v384 = vperm.slane %v48, 5
  %v385 = vmul.f32 %v379, %v381
  %v386 = vmul.f32 %v378, %v382
  %v387 = vmul.f32 %v377, %v383
  %v388 = vmul.f32 %v380, %v384
  %v393 = vrot.slane %v385, 4
  %v394 = vrot.slane %v386, 4
  %v395 = vrot.slane %v387, 4
  %v396 = vrot.slane %v388, 4
  %401 = vst [vmem:[#allocation3 + $0x40] sm:$0xf0] %v393
  %402 = vst [vmem:[#allocation3 + $0x48] sm:$0xf0] %v394
  %403 = vst [vmem:[#allocation3 + $0x50] sm:$0xf0] %v395
  %404 = vst [vmem:[#allocation3 + $0x58] sm:$0xf0] %v396
  %405 = vst [vmem:[#allocation1] ss:$2 sm:$0xff] %v43
  %s406 = scalar_lea.vmem [#allocation1], 16
  %407 = vst [vmem:[%s406] ss:$2 sm:$0xff] %v44
  %v408 = vld.sshfl [vmem:[#allocation1] sm:$0xff pattern:$0x75316420]
  %v409 = vld.sshfl [vmem:[#allocation1 + $0x8] sm:$0xff pattern:$0x75316420]
  %v410 = vld.sshfl [vmem:[#allocation1 + $0x10] sm:$0xff pattern:$0x75316420]
  %v411 = vld.sshfl [vmem:[#allocation1 + $0x18] sm:$0xff pattern:$0x75316420]
  %416 = vrot.lane.b32.xlu0 %v408, 113
  %v417 = vpop.permute.xlu0 %416
  %418 = vrot.lane.b32.xlu0 %v409, 113
  %v419 = vpop.permute.xlu0 %418
  %420 = vrot.lane.b32.xlu0 %v410, 113
  %v421 = vpop.permute.xlu0 %420
  %422 = vrot.lane.b32.xlu0 %v411, 113
  %v423 = vpop.permute.xlu0 %422
  %vm424 = vcmp.lt.s32.totalorder %v192, 113
  %v425 = vsel %vm424, %v421, %v423
  %v426 = vsel %vm424, %v419, %v421
  %v427 = vsel %vm424, %v417, %v419
  %v428 = vsel %vm424, %v423, %v417
  %v429 = vperm.slane %v45, 6
  %v430 = vperm.slane %v46, 6
  %v431 = vperm.slane %v47, 6
  %v432 = vperm.slane %v48, 6
  %v433 = vmul.f32 %v427, %v429
  %v434 = vmul.f32 %v426, %v430
  %v435 = vmul.f32 %v425, %v431
  %v436 = vmul.f32 %v428, %v432
  %437 = vst [vmem:[#allocation3 + $0x60] sm:$0xf] %v433
  %438 = vst [vmem:[#allocation3 + $0x68] sm:$0xf] %v434
  %439 = vst [vmem:[#allocation3 + $0x70] sm:$0xf] %v435
  %440 = vst [vmem:[#allocation3 + $0x78] sm:$0xf] %v436
  %441 = vst [vmem:[#allocation1] ss:$2 sm:$0xff] %v43
  %s442 = scalar_lea.vmem [#allocation1], 16
  %443 = vst [vmem:[%s442] ss:$2 sm:$0xff] %v44
  %v444 = vld.sshfl [vmem:[#allocation1] sm:$0xff pattern:$0x75316420]
  %v445 = vld.sshfl [vmem:[#allocation1 + $0x8] sm:$0xff pattern:$0x75316420]
  %v446 = vld.sshfl [vmem:[#allocation1 + $0x10] sm:$0xff pattern:$0x75316420]
  %v447 = vld.sshfl [vmem:[#allocation1 + $0x18] sm:$0xff pattern:$0x75316420]
  %452 = vrot.lane.b32.xlu0 %v444, 112
  %v453 = vpop.permute.xlu0 %452
  %454 = vrot.lane.b32.xlu0 %v445, 112
  %v455 = vpop.permute.xlu0 %454
  %456 = vrot.lane.b32.xlu0 %v446, 112
  %v457 = vpop.permute.xlu0 %456
  %458 = vrot.lane.b32.xlu0 %v447, 112
  %v459 = vpop.permute.xlu0 %458
  %vm460 = vcmp.lt.s32.totalorder %v192, 112
  %v461 = vsel %vm460, %v457, %v459
  %v462 = vsel %vm460, %v455, %v457
  %v463 = vsel %vm460, %v453, %v455
  %v464 = vsel %vm460, %v459, %v453
  %v465 = vperm.slane %v45, 7
  %v466 = vperm.slane %v46, 7
  %v467 = vperm.slane %v47, 7
  %v468 = vperm.slane %v48, 7
  %v469 = vmul.f32 %v463, %v465
  %v470 = vmul.f32 %v462, %v466
  %v471 = vmul.f32 %v461, %v467
  %v472 = vmul.f32 %v464, %v468
  %v477 = vrot.slane %v469, 4
  %v478 = vrot.slane %v470, 4
  %v479 = vrot.slane %v471, 4
  %v480 = vrot.slane %v472, 4
  %485 = vst [vmem:[#allocation3 + $0x60] sm:$0xf0] %v477
  %486 = vst [vmem:[#allocation3 + $0x68] sm:$0xf0] %v478
  %487 = vst [vmem:[#allocation3 + $0x70] sm:$0xf0] %v479
  %488 = vst [vmem:[#allocation3 + $0x78] sm:$0xf0] %v480
  %489 = vst [vmem:[#allocation1] ss:$2 sm:$0xff] %v43
  %s490 = scalar_lea.vmem [#allocation1], 16
  %491 = vst [vmem:[%s490] ss:$2 sm:$0xff] %v44
  %v492 = vld.sshfl [vmem:[#allocation1] sm:$0xff pattern:$0x75316420]
  %v493 = vld.sshfl [vmem:[#allocation1 + $0x8] sm:$0xff pattern:$0x75316420]
  %v494 = vld.sshfl [vmem:[#allocation1 + $0x10] sm:$0xff pattern:$0x75316420]
  %v495 = vld.sshfl [vmem:[#allocation1 + $0x18] sm:$0xff pattern:$0x75316420]
  %500 = vrot.lane.b32.xlu0 %v492, 111
  %v501 = vpop.permute.xlu0 %500
  %502 = vrot.lane.b32.xlu0 %v493, 111
  %v503 = vpop.permute.xlu0 %502
  %504 = vrot.lane.b32.xlu0 %v494, 111
  %v505 = vpop.permute.xlu0 %504
  %506 = vrot.lane.b32.xlu0 %v495, 111
  %v507 = vpop.permute.xlu0 %506
  %vm508 = vcmp.lt.s32.totalorder %v192, 111
  %v509 = vsel %vm508, %v505, %v507
  %v510 = vsel %vm508, %v503, %v505
  %v511 = vsel %vm508, %v501, %v503
  %v512 = vsel %vm508, %v507, %v501
  %v513 = vperm.slane %v49, 0
  %v514 = vperm.slane %v50, 0
  %v515 = vperm.slane %v51, 0
  %v516 = vperm.slane %v52, 0
  %v517 = vmul.f32 %v511, %v513
  %v518 = vmul.f32 %v510, %v514
  %v519 = vmul.f32 %v509, %v515
  %v520 = vmul.f32 %v512, %v516
  %521 = vst [vmem:[#allocation3 + $0x80] sm:$0xf] %v517
  %522 = vst [vmem:[#allocation3 + $0x88] sm:$0xf] %v518
  %523 = vst [vmem:[#allocation3 + $0x90] sm:$0xf] %v519
  %524 = vst [vmem:[#allocation3 + $0x98] sm:$0xf] %v520
  %v525 = vld [vmem:[#allocation3] sm:$0xff]
  %v526 = vld [vmem:[#allocation3 + $0x8] sm:$0xff]
  %v527 = vld [vmem:[#allocation3 + $0x10] sm:$0xff]
  %v528 = vld [vmem:[#allocation3 + $0x18] sm:$0xff]
  %v529 = vld [vmem:[#allocation3 + $0x20] sm:$0xff]
  %v530 = vld [vmem:[#allocation3 + $0x28] sm:$0xff]
  %v531 = vld [vmem:[#allocation3 + $0x30] sm:$0xff]
  %v532 = vld [vmem:[#allocation3 + $0x38] sm:$0xff]
  %v533 = vld [vmem:[#allocation3 + $0x40] sm:$0xff]
  %v534 = vld [vmem:[#allocation3 + $0x48] sm:$0xff]
  %v535 = vld [vmem:[#allocation3 + $0x50] sm:$0xff]
  %v536 = vld [vmem:[#allocation3 + $0x58] sm:$0xff]
  %v537 = vld [vmem:[#allocation3 + $0x60] sm:$0xff]
  %v538 = vld [vmem:[#allocation3 + $0x68] sm:$0xff]
  %v539 = vld [vmem:[#allocation3 + $0x70] sm:$0xff]
  %v540 = vld [vmem:[#allocation3 + $0x78] sm:$0xff]
  %v541 = vld [vmem:[#allocation3 + $0x80] sm:$0xf]
  %v542 = vld [vmem:[#allocation3 + $0x88] sm:$0xf]
  %v543 = vld [vmem:[#allocation3 + $0x90] sm:$0xf]
  %v544 = vld [vmem:[#allocation3 + $0x98] sm:$0xf]
  %546 = vset.pattern.permute.xlu0 0
  %547 = vperm.xlu0 %546, %v171
  %v548 = vpop.permute.xlu0 %547
  %vm550 = vcmask 293888
  %v552 = vsel %vm550, %v170, 0
  %v555 = vsel %vm81, %v541, 0
  %v558 = vsel %vm81, %v542, 0
  %v561 = vsel %vm81, %v543, 0
  %v564 = vsel %vm81, %v544, 0
  %566 = vmatpush.msra.mxu0 0.0
  %567 = vmatpush.msra.mxu0 0.0
  %568 = vmatpush.msra.mxu0 0.0
  %569 = vmatpush.msra.mxu0 0.0
  %570 = vmatpush.msra.mxu0 0.0
  %571 = vmatpush.msra.mxu0 0.0
  %572 = vmatpush.msra.mxu0 0.0
  %573 = vmatpush.msra.mxu0 0.0
  %574 = vmatpush.msra.mxu0 0.0
  %575 = vmatpush.msra.mxu0 0.0
  %576 = vmatpush.msra.mxu0 0.0
  %577 = vmatpush.msra.mxu0 %v555
  %578 = vmatpush.msra.mxu0 %v537
  %579 = vmatpush.msra.mxu0 %v533
  %580 = vmatpush.msra.mxu0 %v529
  %581 = vmatpush.msra.mxu0 %v525
  %582 = vmatmul.f32.gmra.mxu0 %v552
  %v583 = vpop.f32.mrf.mxu0
  %v584 = vadd.f32 %v548, %v583
  %585 = vdwg.mxu0
  %586 = vmatpush.msra.mxu0 0.0
  %587 = vmatpush.msra.mxu0 0.0
  %588 = vmatpush.msra.mxu0 0.0
  %589 = vmatpush.msra.mxu0 0.0
  %590 = vmatpush.msra.mxu0 0.0
  %591 = vmatpush.msra.mxu0 0.0
  %592 = vmatpush.msra.mxu0 0.0
  %593 = vmatpush.msra.mxu0 0.0
  %594 = vmatpush.msra.mxu0 0.0
  %595 = vmatpush.msra.mxu0 0.0
  %596 = vmatpush.msra.mxu0 0.0
  %597 = vmatpush.msra.mxu0 %v558
  %598 = vmatpush.msra.mxu0 %v538
  %599 = vmatpush.msra.mxu0 %v534
  %600 = vmatpush.msra.mxu0 %v530
  %601 = vmatpush.msra.mxu0 %v526
  %602 = vmatmul.f32.gmra.mxu0 %v552
  %v603 = vpop.f32.mrf.mxu0
  %v604 = vadd.f32 %v548, %v603
  %605 = vdwg.mxu0
  %606 = vmatpush.msra.mxu0 0.0
  %607 = vmatpush.msra.mxu0 0.0
  %608 = vmatpush.msra.mxu0 0.0
  %609 = vmatpush.msra.mxu0 0.0
  %610 = vmatpush.msra.mxu0 0.0
  %611 = vmatpush.msra.mxu0 0.0
  %612 = vmatpush.msra.mxu0 0.0
  %613 = vmatpush.msra.mxu0 0.0
  %614 = vmatpush.msra.mxu0 0.0
  %615 = vmatpush.msra.mxu0 0.0
  %616 = vmatpush.msra.mxu0 0.0
  %617 = vmatpush.msra.mxu0 %v561
  %618 = vmatpush.msra.mxu0 %v539
  %619 = vmatpush.msra.mxu0 %v535
  %620 = vmatpush.msra.mxu0 %v531
  %621 = vmatpush.msra.mxu0 %v527
  %622 = vmatmul.f32.gmra.mxu0 %v552
  %v623 = vpop.f32.mrf.mxu0
  %v624 = vadd.f32 %v548, %v623
  %625 = vdwg.mxu0
  %626 = vmatpush.msra.mxu0 0.0
  %627 = vmatpush.msra.mxu0 0.0
  %628 = vmatpush.msra.mxu0 0.0
  %629 = vmatpush.msra.mxu0 0.0
  %630 = vmatpush.msra.mxu0 0.0
  %631 = vmatpush.msra.mxu0 0.0
  %632 = vmatpush.msra.mxu0 0.0
  %633 = vmatpush.msra.mxu0 0.0
  %634 = vmatpush.msra.mxu0 0.0
  %635 = vmatpush.msra.mxu0 0.0
  %636 = vmatpush.msra.mxu0 0.0
  %637 = vmatpush.msra.mxu0 %v564
  %638 = vmatpush.msra.mxu0 %v540
  %639 = vmatpush.msra.mxu0 %v536
  %640 = vmatpush.msra.mxu0 %v532
  %641 = vmatpush.msra.mxu0 %v528
  %642 = vmatmul.f32.gmra.mxu0 %v552
  %v643 = vpop.f32.mrf.mxu0
  %v644 = vadd.f32 %v548, %v643
  %645 = vdwg.mxu0
  %v646 = vmax.f32 %v584, 0.0
  %v647 = vmax.f32 %v604, 0.0
  %v648 = vmax.f32 %v624, 0.0
  %v649 = vmax.f32 %v644, 0.0
  %v650 = vld [vmem:[%s5] sm:$0xff]
  %v651 = vld [vmem:[%s6] sm:$0xff]
  %652 = vrot.lane.b32.xlu0 %v646, 34
  %v653 = vpop.permute.xlu0 %652
  %654 = vrot.lane.b32.xlu0 %v647, 34
  %v655 = vpop.permute.xlu0 %654
  %656 = vrot.lane.b32.xlu0 %v648, 34
  %v657 = vpop.permute.xlu0 %656
  %658 = vrot.lane.b32.xlu0 %v649, 34
  %v659 = vpop.permute.xlu0 %658
  %vm660 = vcmp.lt.s32.totalorder %v192, 34
  %v661 = vsel %vm660, %v657, %v659
  %v662 = vsel %vm660, %v655, %v657
  %v663 = vsel %vm660, %v653, %v655
  %v664 = vsel %vm660, %v659, %v653
  %v665 = vperm.slane %v53, 0
  %v666 = vperm.slane %v54, 0
  %v667 = vperm.slane %v55, 0
  %v668 = vperm.slane %v56, 0
  %v669 = vmul.f32 %v664, %v665
  %v670 = vmul.f32 %v663, %v666
  %v671 = vmul.f32 %v662, %v667
  %v672 = vmul.f32 %v661, %v668
  %673 = vst [vmem:[#allocation3] sm:$0xff] %v669
  %674 = vst [vmem:[#allocation3 + $0x8] sm:$0xff] %v670
  %675 = vst [vmem:[#allocation3 + $0x10] sm:$0xff] %v671
  %676 = vst [vmem:[#allocation3 + $0x18] sm:$0xff] %v672
  %677 = vrot.lane.b32.xlu0 %v646, 32
  %v678 = vpop.permute.xlu0 %677
  %679 = vrot.lane.b32.xlu0 %v647, 32
  %v680 = vpop.permute.xlu0 %679
  %681 = vrot.lane.b32.xlu0 %v648, 32
  %v682 = vpop.permute.xlu0 %681
  %683 = vrot.lane.b32.xlu0 %v649, 32
  %v684 = vpop.permute.xlu0 %683
  %vm685 = vcmp.lt.s32.totalorder %v192, 32
  %v686 = vsel %vm685, %v682, %v684
  %v687 = vsel %vm685, %v680, %v682
  %v688 = vsel %vm685, %v678, %v680
  %v689 = vsel %vm685, %v684, %v678
  %v690 = vperm.slane %v53, 1
  %v691 = vperm.slane %v54, 1
  %v692 = vperm.slane %v55, 1
  %v693 = vperm.slane %v56, 1
  %v694 = vmul.f32 %v689, %v690
  %v695 = vmul.f32 %v688, %v691
  %v696 = vmul.f32 %v687, %v692
  %v697 = vmul.f32 %v686, %v693
  %698 = vst [vmem:[#allocation3 + $0x20] sm:$0xff] %v694
  %699 = vst [vmem:[#allocation3 + $0x28] sm:$0xff] %v695
  %700 = vst [vmem:[#allocation3 + $0x30] sm:$0xff] %v696
  %701 = vst [vmem:[#allocation3 + $0x38] sm:$0xff] %v697
  %702 = vrot.lane.b32.xlu0 %v646, 30
  %v703 = vpop.permute.xlu0 %702
  %704 = vrot.lane.b32.xlu0 %v647, 30
  %v705 = vpop.permute.xlu0 %704
  %706 = vrot.lane.b32.xlu0 %v648, 30
  %v707 = vpop.permute.xlu0 %706
  %708 = vrot.lane.b32.xlu0 %v649, 30
  %v709 = vpop.permute.xlu0 %708
  %vm710 = vcmp.lt.s32.totalorder %v192, 30
  %v711 = vsel %vm710, %v707, %v709
  %v712 = vsel %vm710, %v705, %v707
  %v713 = vsel %vm710, %v703, %v705
  %v714 = vsel %vm710, %v709, %v703
  %v715 = vperm.slane %v53, 2
  %v716 = vperm.slane %v54, 2
  %v717 = vperm.slane %v55, 2
  %v718 = vperm.slane %v56, 2
  %v719 = vmul.f32 %v714, %v715
  %v720 = vmul.f32 %v713, %v716
  %v721 = vmul.f32 %v712, %v717
  %v722 = vmul.f32 %v711, %v718
  %723 = vst [vmem:[#allocation3 + $0x40] sm:$0xff] %v719
  %724 = vst [vmem:[#allocation3 + $0x48] sm:$0xff] %v720
  %725 = vst [vmem:[#allocation3 + $0x50] sm:$0xff] %v721
  %726 = vst [vmem:[#allocation3 + $0x58] sm:$0xff] %v722
  %727 = vrot.lane.b32.xlu0 %v646, 2
  %v728 = vpop.permute.xlu0 %727
  %729 = vrot.lane.b32.xlu0 %v647, 2
  %v730 = vpop.permute.xlu0 %729
  %731 = vrot.lane.b32.xlu0 %v648, 2
  %v732 = vpop.permute.xlu0 %731
  %733 = vrot.lane.b32.xlu0 %v649, 2
  %v734 = vpop.permute.xlu0 %733
  %vm735 = vcmp.lt.s32.totalorder %v192, 2
  %v736 = vsel %vm735, %v732, %v734
  %v737 = vsel %vm735, %v730, %v732
  %v738 = vsel %vm735, %v728, %v730
  %v739 = vsel %vm735, %v734, %v728
  %v740 = vperm.slane %v53, 3
  %v741 = vperm.slane %v54, 3
  %v742 = vperm.slane %v55, 3
  %v743 = vperm.slane %v56, 3
  %v744 = vmul.f32 %v739, %v740
  %v745 = vmul.f32 %v738, %v741
  %v746 = vmul.f32 %v737, %v742
  %v747 = vmul.f32 %v736, %v743
  %748 = vst [vmem:[#allocation3 + $0x60] sm:$0xff] %v744
  %749 = vst [vmem:[#allocation3 + $0x68] sm:$0xff] %v745
  %750 = vst [vmem:[#allocation3 + $0x70] sm:$0xff] %v746
  %751 = vst [vmem:[#allocation3 + $0x78] sm:$0xff] %v747
  %752 = vst [vmem:[#allocation3 + $0x80] sm:$0xff] %v646
  %753 = vst [vmem:[#allocation3 + $0x88] sm:$0xff] %v647
  %754 = vst [vmem:[#allocation3 + $0x90] sm:$0xff] %v648
  %755 = vst [vmem:[#allocation3 + $0x98] sm:$0xff] %v649
  %756 = vrot.lane.b32.xlu0 %v646, 126
  %v757 = vpop.permute.xlu0 %756
  %758 = vrot.lane.b32.xlu0 %v647, 126
  %v759 = vpop.permute.xlu0 %758
  %760 = vrot.lane.b32.xlu0 %v648, 126
  %v761 = vpop.permute.xlu0 %760
  %762 = vrot.lane.b32.xlu0 %v649, 126
  %v763 = vpop.permute.xlu0 %762
  %vm764 = vcmp.lt.s32.totalorder %v192, 126
  %v765 = vsel %vm764, %v761, %v763
  %v766 = vsel %vm764, %v759, %v761
  %v767 = vsel %vm764, %v757, %v759
  %v768 = vsel %vm764, %v763, %v757
  %v769 = vperm.slane %v53, 5
  %v770 = vperm.slane %v54, 5
  %v771 = vperm.slane %v55, 5
  %v772 = vperm.slane %v56, 5
  %v773 = vmul.f32 %v767, %v769
  %v774 = vmul.f32 %v766, %v770
  %v775 = vmul.f32 %v765, %v771
  %v776 = vmul.f32 %v768, %v772
  %777 = vst [vmem:[#allocation3 + $0xa0] sm:$0xff] %v773
  %778 = vst [vmem:[#allocation3 + $0xa8] sm:$0xff] %v774
  %779 = vst [vmem:[#allocation3 + $0xb0] sm:$0xff] %v775
  %780 = vst [vmem:[#allocation3 + $0xb8] sm:$0xff] %v776
  %781 = vrot.lane.b32.xlu0 %v646, 98
  %v782 = vpop.permute.xlu0 %781
  %783 = vrot.lane.b32.xlu0 %v647, 98
  %v784 = vpop.permute.xlu0 %783
  %785 = vrot.lane.b32.xlu0 %v648, 98
  %v786 = vpop.permute.xlu0 %785
  %787 = vrot.lane.b32.xlu0 %v649, 98
  %v788 = vpop.permute.xlu0 %787
  %vm789 = vcmp.lt.s32.totalorder %v192, 98
  %v790 = vsel %vm789, %v786, %v788
  %v791 = vsel %vm789, %v784, %v786
  %v792 = vsel %vm789, %v782, %v784
  %v793 = vsel %vm789, %v788, %v782
  %v794 = vperm.slane %v53, 6
  %v795 = vperm.slane %v54, 6
  %v796 = vperm.slane %v55, 6
  %v797 = vperm.slane %v56, 6
  %v798 = vmul.f32 %v792, %v794
  %v799 = vmul.f32 %v791, %v795
  %v800 = vmul.f32 %v790, %v796
  %v801 = vmul.f32 %v793, %v797
  %802 = vst [vmem:[#allocation3 + $0xc0] sm:$0xff] %v798
  %803 = vst [vmem:[#allocation3 + $0xc8] sm:$0xff] %v799
  %804 = vst [vmem:[#allocation3 + $0xd0] sm:$0xff] %v800
  %805 = vst [vmem:[#allocation3 + $0xd8] sm:$0xff] %v801
  %806 = vrot.lane.b32.xlu0 %v646, 96
  %v807 = vpop.permute.xlu0 %806
  %808 = vrot.lane.b32.xlu0 %v647, 96
  %v809 = vpop.permute.xlu0 %808
  %810 = vrot.lane.b32.xlu0 %v648, 96
  %v811 = vpop.permute.xlu0 %810
  %812 = vrot.lane.b32.xlu0 %v649, 96
  %v813 = vpop.permute.xlu0 %812
  %vm814 = vcmp.lt.s32.totalorder %v192, 96
  %v815 = vsel %vm814, %v811, %v813
  %v816 = vsel %vm814, %v809, %v811
  %v817 = vsel %vm814, %v807, %v809
  %v818 = vsel %vm814, %v813, %v807
  %v819 = vperm.slane %v53, 7
  %v820 = vperm.slane %v54, 7
  %v821 = vperm.slane %v55, 7
  %v822 = vperm.slane %v56, 7
  %v823 = vmul.f32 %v817, %v819
  %v824 = vmul.f32 %v816, %v820
  %v825 = vmul.f32 %v815, %v821
  %v826 = vmul.f32 %v818, %v822
  %827 = vst [vmem:[#allocation3 + $0xe0] sm:$0xff] %v823
  %828 = vst [vmem:[#allocation3 + $0xe8] sm:$0xff] %v824
  %829 = vst [vmem:[#allocation3 + $0xf0] sm:$0xff] %v825
  %830 = vst [vmem:[#allocation3 + $0xf8] sm:$0xff] %v826
  %831 = vrot.lane.b32.xlu0 %v646, 94
  %v832 = vpop.permute.xlu0 %831
  %833 = vrot.lane.b32.xlu0 %v647, 94
  %v834 = vpop.permute.xlu0 %833
  %835 = vrot.lane.b32.xlu0 %v648, 94
  %v836 = vpop.permute.xlu0 %835
  %837 = vrot.lane.b32.xlu0 %v649, 94
  %v838 = vpop.permute.xlu0 %837
  %vm839 = vcmp.lt.s32.totalorder %v192, 94
  %v840 = vsel %vm839, %v836, %v838
  %v841 = vsel %vm839, %v834, %v836
  %v842 = vsel %vm839, %v832, %v834
  %v843 = vsel %vm839, %v838, %v832
  %v844 = vperm.slane %v57, 0
  %v845 = vperm.slane %v58, 0
  %v846 = vperm.slane %v59, 0
  %v847 = vperm.slane %v60, 0
  %v848 = vmul.f32 %v842, %v844
  %v849 = vmul.f32 %v841, %v845
  %v850 = vmul.f32 %v840, %v846
  %v851 = vmul.f32 %v843, %v847
  %852 = vst [vmem:[#allocation3 + $0x100] sm:$0xff] %v848
  %853 = vst [vmem:[#allocation3 + $0x108] sm:$0xff] %v849
  %854 = vst [vmem:[#allocation3 + $0x110] sm:$0xff] %v850
  %855 = vst [vmem:[#allocation3 + $0x118] sm:$0xff] %v851
  %v856 = vld [vmem:[#allocation3] sm:$0xff]
  %v857 = vld [vmem:[#allocation3 + $0x8] sm:$0xff]
  %v858 = vld [vmem:[#allocation3 + $0x10] sm:$0xff]
  %v859 = vld [vmem:[#allocation3 + $0x18] sm:$0xff]
  %v860 = vld [vmem:[#allocation3 + $0x20] sm:$0xff]
  %v861 = vld [vmem:[#allocation3 + $0x28] sm:$0xff]
  %v862 = vld [vmem:[#allocation3 + $0x30] sm:$0xff]
  %v863 = vld [vmem:[#allocation3 + $0x38] sm:$0xff]
  %v864 = vld [vmem:[#allocation3 + $0x40] sm:$0xff]
  %v865 = vld [vmem:[#allocation3 + $0x48] sm:$0xff]
  %v866 = vld [vmem:[#allocation3 + $0x50] sm:$0xff]
  %v867 = vld [vmem:[#allocation3 + $0x58] sm:$0xff]
  %v868 = vld [vmem:[#allocation3 + $0x60] sm:$0xff]
  %v869 = vld [vmem:[#allocation3 + $0x68] sm:$0xff]
  %v870 = vld [vmem:[#allocation3 + $0x70] sm:$0xff]
  %v871 = vld [vmem:[#allocation3 + $0x78] sm:$0xff]
  %v872 = vld [vmem:[#allocation3 + $0x80] sm:$0xff]
  %v873 = vld [vmem:[#allocation3 + $0x88] sm:$0xff]
  %v874 = vld [vmem:[#allocation3 + $0x90] sm:$0xff]
  %v875 = vld [vmem:[#allocation3 + $0x98] sm:$0xff]
  %v876 = vld [vmem:[#allocation3 + $0xa0] sm:$0xff]
  %v877 = vld [vmem:[#allocation3 + $0xa8] sm:$0xff]
  %v878 = vld [vmem:[#allocation3 + $0xb0] sm:$0xff]
  %v879 = vld [vmem:[#allocation3 + $0xb8] sm:$0xff]
  %v880 = vld [vmem:[#allocation3 + $0xc0] sm:$0xff]
  %v881 = vld [vmem:[#allocation3 + $0xc8] sm:$0xff]
  %v882 = vld [vmem:[#allocation3 + $0xd0] sm:$0xff]
  %v883 = vld [vmem:[#allocation3 + $0xd8] sm:$0xff]
  %v884 = vld [vmem:[#allocation3 + $0xe0] sm:$0xff]
  %v885 = vld [vmem:[#allocation3 + $0xe8] sm:$0xff]
  %v886 = vld [vmem:[#allocation3 + $0xf0] sm:$0xff]
  %v887 = vld [vmem:[#allocation3 + $0xf8] sm:$0xff]
  %v888 = vld [vmem:[#allocation3 + $0x100] sm:$0xff]
  %v889 = vld [vmem:[#allocation3 + $0x108] sm:$0xff]
  %v890 = vld [vmem:[#allocation3 + $0x110] sm:$0xff]
  %v891 = vld [vmem:[#allocation3 + $0x118] sm:$0xff]
  %893 = vset.pattern.permute.xlu0 0
  %894 = vperm.xlu0 %893, %v651
  %v895 = vpop.permute.xlu0 %894
  %vm897 = vcmask 588800
  %v899 = vsel %vm897, %v650, 0
  %901 = vmatpush.msra.mxu0 0.0
  %902 = vmatpush.msra.mxu0 0.0
  %903 = vmatpush.msra.mxu0 0.0
  %904 = vmatpush.msra.mxu0 0.0
  %905 = vmatpush.msra.mxu0 0.0
  %906 = vmatpush.msra.mxu0 0.0
  %907 = vmatpush.msra.mxu0 0.0
  %908 = vmatpush.msra.mxu0 %v888
  %909 = vmatpush.msra.mxu0 %v884
  %910 = vmatpush.msra.mxu0 %v880
  %911 = vmatpush.msra.mxu0 %v876
  %912 = vmatpush.msra.mxu0 %v872
  %913 = vmatpush.msra.mxu0 %v868
  %914 = vmatpush.msra.mxu0 %v864
  %915 = vmatpush.msra.mxu0 %v860
  %916 = vmatpush.msra.mxu0 %v856
  %917 = vmatmul.f32.gmra.mxu0 %v899
  %v918 = vpop.f32.mrf.mxu0
  %v919 = vadd.f32 %v895, %v918
  %920 = vdwg.mxu0
  %921 = vmatpush.msra.mxu0 0.0
  %922 = vmatpush.msra.mxu0 0.0
  %923 = vmatpush.msra.mxu0 0.0
  %924 = vmatpush.msra.mxu0 0.0
  %925 = vmatpush.msra.mxu0 0.0
  %926 = vmatpush.msra.mxu0 0.0
  %927 = vmatpush.msra.mxu0 0.0
  %928 = vmatpush.msra.mxu0 %v889
  %929 = vmatpush.msra.mxu0 %v885
  %930 = vmatpush.msra.mxu0 %v881
  %931 = vmatpush.msra.mxu0 %v877
  %932 = vmatpush.msra.mxu0 %v873
  %933 = vmatpush.msra.mxu0 %v869
  %934 = vmatpush.msra.mxu0 %v865
  %935 = vmatpush.msra.mxu0 %v861
  %936 = vmatpush.msra.mxu0 %v857
  %937 = vmatmul.f32.gmra.mxu0 %v899
  %v938 = vpop.f32.mrf.mxu0
  %v939 = vadd.f32 %v895, %v938
  %940 = vdwg.mxu0
  %941 = vmatpush.msra.mxu0 0.0
  %942 = vmatpush.msra.mxu0 0.0
  %943 = vmatpush.msra.mxu0 0.0
  %944 = vmatpush.msra.mxu0 0.0
  %945 = vmatpush.msra.mxu0 0.0
  %946 = vmatpush.msra.mxu0 0.0
  %947 = vmatpush.msra.mxu0 0.0
  %948 = vmatpush.msra.mxu0 %v890
  %949 = vmatpush.msra.mxu0 %v886
  %950 = vmatpush.msra.mxu0 %v882
  %951 = vmatpush.msra.mxu0 %v878
  %952 = vmatpush.msra.mxu0 %v874
  %953 = vmatpush.msra.mxu0 %v870
  %954 = vmatpush.msra.mxu0 %v866
  %955 = vmatpush.msra.mxu0 %v862
  %956 = vmatpush.msra.mxu0 %v858
  %957 = vmatmul.f32.gmra.mxu0 %v899
  %v958 = vpop.f32.mrf.mxu0
  %v959 = vadd.f32 %v895, %v958
  %960 = vdwg.mxu0
  %961 = vmatpush.msra.mxu0 0.0
  %962 = vmatpush.msra.mxu0 0.0
  %963 = vmatpush.msra.mxu0 0.0
  %964 = vmatpush.msra.mxu0 0.0
  %965 = vmatpush.msra.mxu0 0.0
  %966 = vmatpush.msra.mxu0 0.0
  %967 = vmatpush.msra.mxu0 0.0
  %968 = vmatpush.msra.mxu0 %v891
  %969 = vmatpush.msra.mxu0 %v887
  %970 = vmatpush.msra.mxu0 %v883
  %971 = vmatpush.msra.mxu0 %v879
  %972 = vmatpush.msra.mxu0 %v875
  %973 = vmatpush.msra.mxu0 %v871
  %974 = vmatpush.msra.mxu0 %v867
  %975 = vmatpush.msra.mxu0 %v863
  %976 = vmatpush.msra.mxu0 %v859
  %977 = vmatmul.f32.gmra.mxu0 %v899
  %v978 = vpop.f32.mrf.mxu0
  %v979 = vadd.f32 %v895, %v978
  %980 = vdwg.mxu0
  %v981 = vmax.f32 %v919, 0.0
  %v982 = vmax.f32 %v939, 0.0
  %v983 = vmax.f32 %v959, 0.0
  %v984 = vmax.f32 %v979, 0.0
  %v985 = vld [vmem:[%s7] sm:$0xff]
  %v986 = vld [vmem:[%s8] sm:$0xff]
  %987 = vrot.lane.b32.xlu0 %v981, 17
  %v988 = vpop.permute.xlu0 %987
  %989 = vrot.lane.b32.xlu0 %v982, 17
  %v990 = vpop.permute.xlu0 %989
  %991 = vrot.lane.b32.xlu0 %v983, 17
  %v992 = vpop.permute.xlu0 %991
  %993 = vrot.lane.b32.xlu0 %v984, 17
  %v994 = vpop.permute.xlu0 %993
  %v995 = vsel %vm193, %v992, %v994
  %v996 = vsel %vm193, %v990, %v992
  %v997 = vsel %vm193, %v988, %v990
  %v998 = vsel %vm193, %v994, %v988
  %v999 = vmul.f32 %v998, %v198
  %v1000 = vmul.f32 %v997, %v199
  %v1001 = vmul.f32 %v996, %v200
  %v1002 = vmul.f32 %v995, %v201
  %1003 = vst [vmem:[#allocation3] sm:$0xff] %v999
  %1004 = vst [vmem:[#allocation3 + $0x8] sm:$0xff] %v1000
  %1005 = vst [vmem:[#allocation3 + $0x10] sm:$0xff] %v1001
  %1006 = vst [vmem:[#allocation3 + $0x18] sm:$0xff] %v1002
  %1007 = vrot.lane.b32.xlu0 %v981, 16
  %v1008 = vpop.permute.xlu0 %1007
  %1009 = vrot.lane.b32.xlu0 %v982, 16
  %v1010 = vpop.permute.xlu0 %1009
  %1011 = vrot.lane.b32.xlu0 %v983, 16
  %v1012 = vpop.permute.xlu0 %1011
  %1013 = vrot.lane.b32.xlu0 %v984, 16
  %v1014 = vpop.permute.xlu0 %1013
  %v1015 = vsel %vm229, %v1012, %v1014
  %v1016 = vsel %vm229, %v1010, %v1012
  %v1017 = vsel %vm229, %v1008, %v1010
  %v1018 = vsel %vm229, %v1014, %v1008
  %v1019 = vmul.f32 %v1018, %v234
  %v1020 = vmul.f32 %v1017, %v235
  %v1021 = vmul.f32 %v1016, %v236
  %v1022 = vmul.f32 %v1015, %v237
  %1023 = vst [vmem:[#allocation3 + $0x20] sm:$0xff] %v1019
  %1024 = vst [vmem:[#allocation3 + $0x28] sm:$0xff] %v1020
  %1025 = vst [vmem:[#allocation3 + $0x30] sm:$0xff] %v1021
  %1026 = vst [vmem:[#allocation3 + $0x38] sm:$0xff] %v1022
  %1027 = vrot.lane.b32.xlu0 %v981, 15
  %v1028 = vpop.permute.xlu0 %1027
  %1029 = vrot.lane.b32.xlu0 %v982, 15
  %v1030 = vpop.permute.xlu0 %1029
  %1031 = vrot.lane.b32.xlu0 %v983, 15
  %v1032 = vpop.permute.xlu0 %1031
  %1033 = vrot.lane.b32.xlu0 %v984, 15
  %v1034 = vpop.permute.xlu0 %1033
  %v1035 = vsel %vm277, %v1032, %v1034
  %v1036 = vsel %vm277, %v1030, %v1032
  %v1037 = vsel %vm277, %v1028, %v1030
  %v1038 = vsel %vm277, %v1034, %v1028
  %v1039 = vmul.f32 %v1038, %v282
  %v1040 = vmul.f32 %v1037, %v283
  %v1041 = vmul.f32 %v1036, %v284
  %v1042 = vmul.f32 %v1035, %v285
  %1043 = vst [vmem:[#allocation3 + $0x40] sm:$0xff] %v1039
  %1044 = vst [vmem:[#allocation3 + $0x48] sm:$0xff] %v1040
  %1045 = vst [vmem:[#allocation3 + $0x50] sm:$0xff] %v1041
  %1046 = vst [vmem:[#allocation3 + $0x58] sm:$0xff] %v1042
  %1047 = vrot.lane.b32.xlu0 %v981, 1
  %v1048 = vpop.permute.xlu0 %1047
  %1049 = vrot.lane.b32.xlu0 %v982, 1
  %v1050 = vpop.permute.xlu0 %1049
  %1051 = vrot.lane.b32.xlu0 %v983, 1
  %v1052 = vpop.permute.xlu0 %1051
  %1053 = vrot.lane.b32.xlu0 %v984, 1
  %v1054 = vpop.permute.xlu0 %1053
  %v1055 = vsel %vm313, %v1052, %v1054
  %v1056 = vsel %vm313, %v1050, %v1052
  %v1057 = vsel %vm313, %v1048, %v1050
  %v1058 = vsel %vm313, %v1054, %v1048
  %v1059 = vmul.f32 %v1058, %v318
  %v1060 = vmul.f32 %v1057, %v319
  %v1061 = vmul.f32 %v1056, %v320
  %v1062 = vmul.f32 %v1055, %v321
  %1063 = vst [vmem:[#allocation3 + $0x60] sm:$0xff] %v1059
  %1064 = vst [vmem:[#allocation3 + $0x68] sm:$0xff] %v1060
  %1065 = vst [vmem:[#allocation3 + $0x70] sm:$0xff] %v1061
  %1066 = vst [vmem:[#allocation3 + $0x78] sm:$0xff] %v1062
  %1067 = vst [vmem:[#allocation3 + $0x80] sm:$0xff] %v981
  %1068 = vst [vmem:[#allocation3 + $0x88] sm:$0xff] %v982
  %1069 = vst [vmem:[#allocation3 + $0x90] sm:$0xff] %v983
  %1070 = vst [vmem:[#allocation3 + $0x98] sm:$0xff] %v984
  %1071 = vrot.lane.b32.xlu0 %v981, 127
  %v1072 = vpop.permute.xlu0 %1071
  %1073 = vrot.lane.b32.xlu0 %v982, 127
  %v1074 = vpop.permute.xlu0 %1073
  %1075 = vrot.lane.b32.xlu0 %v983, 127
  %v1076 = vpop.permute.xlu0 %1075
  %1077 = vrot.lane.b32.xlu0 %v984, 127
  %v1078 = vpop.permute.xlu0 %1077
  %v1079 = vsel %vm376, %v1076, %v1078
  %v1080 = vsel %vm376, %v1074, %v1076
  %v1081 = vsel %vm376, %v1072, %v1074
  %v1082 = vsel %vm376, %v1078, %v1072
  %v1083 = vmul.f32 %v1081, %v381
  %v1084 = vmul.f32 %v1080, %v382
  %v1085 = vmul.f32 %v1079, %v383
  %v1086 = vmul.f32 %v1082, %v384
  %1087 = vst [vmem:[#allocation3 + $0xa0] sm:$0xff] %v1083
  %1088 = vst [vmem:[#allocation3 + $0xa8] sm:$0xff] %v1084
  %1089 = vst [vmem:[#allocation3 + $0xb0] sm:$0xff] %v1085
  %1090 = vst [vmem:[#allocation3 + $0xb8] sm:$0xff] %v1086
  %1091 = vrot.lane.b32.xlu0 %v981, 113
  %v1092 = vpop.permute.xlu0 %1091
  %1093 = vrot.lane.b32.xlu0 %v982, 113
  %v1094 = vpop.permute.xlu0 %1093
  %1095 = vrot.lane.b32.xlu0 %v983, 113
  %v1096 = vpop.permute.xlu0 %1095
  %1097 = vrot.lane.b32.xlu0 %v984, 113
  %v1098 = vpop.permute.xlu0 %1097
  %v1099 = vsel %vm424, %v1096, %v1098
  %v1100 = vsel %vm424, %v1094, %v1096
  %v1101 = vsel %vm424, %v1092, %v1094
  %v1102 = vsel %vm424, %v1098, %v1092
  %v1103 = vmul.f32 %v1101, %v429
  %v1104 = vmul.f32 %v1100, %v430
  %v1105 = vmul.f32 %v1099, %v431
  %v1106 = vmul.f32 %v1102, %v432
  %1107 = vst [vmem:[#allocation3 + $0xc0] sm:$0xff] %v1103
  %1108 = vst [vmem:[#allocation3 + $0xc8] sm:$0xff] %v1104
  %1109 = vst [vmem:[#allocation3 + $0xd0] sm:$0xff] %v1105
  %1110 = vst [vmem:[#allocation3 + $0xd8] sm:$0xff] %v1106
  %1111 = vrot.lane.b32.xlu0 %v981, 112
  %v1112 = vpop.permute.xlu0 %1111
  %1113 = vrot.lane.b32.xlu0 %v982, 112
  %v1114 = vpop.permute.xlu0 %1113
  %1115 = vrot.lane.b32.xlu0 %v983, 112
  %v1116 = vpop.permute.xlu0 %1115
  %1117 = vrot.lane.b32.xlu0 %v984, 112
  %v1118 = vpop.permute.xlu0 %1117
  %v1119 = vsel %vm460, %v1116, %v1118
  %v1120 = vsel %vm460, %v1114, %v1116
  %v1121 = vsel %vm460, %v1112, %v1114
  %v1122 = vsel %vm460, %v1118, %v1112
  %v1123 = vmul.f32 %v1121, %v465
  %v1124 = vmul.f32 %v1120, %v466
  %v1125 = vmul.f32 %v1119, %v467
  %v1126 = vmul.f32 %v1122, %v468
  %1127 = vst [vmem:[#allocation3 + $0xe0] sm:$0xff] %v1123
  %1128 = vst [vmem:[#allocation3 + $0xe8] sm:$0xff] %v1124
  %1129 = vst [vmem:[#allocation3 + $0xf0] sm:$0xff] %v1125
  %1130 = vst [vmem:[#allocation3 + $0xf8] sm:$0xff] %v1126
  %1131 = vrot.lane.b32.xlu0 %v981, 111
  %v1132 = vpop.permute.xlu0 %1131
  %1133 = vrot.lane.b32.xlu0 %v982, 111
  %v1134 = vpop.permute.xlu0 %1133
  %1135 = vrot.lane.b32.xlu0 %v983, 111
  %v1136 = vpop.permute.xlu0 %1135
  %1137 = vrot.lane.b32.xlu0 %v984, 111
  %v1138 = vpop.permute.xlu0 %1137
  %v1139 = vsel %vm508, %v1136, %v1138
  %v1140 = vsel %vm508, %v1134, %v1136
  %v1141 = vsel %vm508, %v1132, %v1134
  %v1142 = vsel %vm508, %v1138, %v1132
  %v1143 = vmul.f32 %v1141, %v513
  %v1144 = vmul.f32 %v1140, %v514
  %v1145 = vmul.f32 %v1139, %v515
  %v1146 = vmul.f32 %v1142, %v516
  %1147 = vst [vmem:[#allocation3 + $0x100] sm:$0xff] %v1143
  %1148 = vst [vmem:[#allocation3 + $0x108] sm:$0xff] %v1144
  %1149 = vst [vmem:[#allocation3 + $0x110] sm:$0xff] %v1145
  %1150 = vst [vmem:[#allocation3 + $0x118] sm:$0xff] %v1146
  %v1151 = vld [vmem:[#allocation3] sm:$0xff]
  %v1152 = vld [vmem:[#allocation3 + $0x8] sm:$0xff]
  %v1153 = vld [vmem:[#allocation3 + $0x10] sm:$0xff]
  %v1154 = vld [vmem:[#allocation3 + $0x18] sm:$0xff]
  %v1155 = vld [vmem:[#allocation3 + $0x20] sm:$0xff]
  %v1156 = vld [vmem:[#allocation3 + $0x28] sm:$0xff]
  %v1157 = vld [vmem:[#allocation3 + $0x30] sm:$0xff]
  %v1158 = vld [vmem:[#allocation3 + $0x38] sm:$0xff]
  %v1159 = vld [vmem:[#allocation3 + $0x40] sm:$0xff]
  %v1160 = vld [vmem:[#allocation3 + $0x48] sm:$0xff]
  %v1161 = vld [vmem:[#allocation3 + $0x50] sm:$0xff]
  %v1162 = vld [vmem:[#allocation3 + $0x58] sm:$0xff]
  %v1163 = vld [vmem:[#allocation3 + $0x60] sm:$0xff]
  %v1164 = vld [vmem:[#allocation3 + $0x68] sm:$0xff]
  %v1165 = vld [vmem:[#allocation3 + $0x70] sm:$0xff]
  %v1166 = vld [vmem:[#allocation3 + $0x78] sm:$0xff]
  %v1167 = vld [vmem:[#allocation3 + $0x80] sm:$0xff]
  %v1168 = vld [vmem:[#allocation3 + $0x88] sm:$0xff]
  %v1169 = vld [vmem:[#allocation3 + $0x90] sm:$0xff]
  %v1170 = vld [vmem:[#allocation3 + $0x98] sm:$0xff]
  %v1171 = vld [vmem:[#allocation3 + $0xa0] sm:$0xff]
  %v1172 = vld [vmem:[#allocation3 + $0xa8] sm:$0xff]
  %v1173 = vld [vmem:[#allocation3 + $0xb0] sm:$0xff]
  %v1174 = vld [vmem:[#allocation3 + $0xb8] sm:$0xff]
  %v1175 = vld [vmem:[#allocation3 + $0xc0] sm:$0xff]
  %v1176 = vld [vmem:[#allocation3 + $0xc8] sm:$0xff]
  %v1177 = vld [vmem:[#allocation3 + $0xd0] sm:$0xff]
  %v1178 = vld [vmem:[#allocation3 + $0xd8] sm:$0xff]
  %v1179 = vld [vmem:[#allocation3 + $0xe0] sm:$0xff]
  %v1180 = vld [vmem:[#allocation3 + $0xe8] sm:$0xff]
  %v1181 = vld [vmem:[#allocation3 + $0xf0] sm:$0xff]
  %v1182 = vld [vmem:[#allocation3 + $0xf8] sm:$0xff]
  %v1183 = vld [vmem:[#allocation3 + $0x100] sm:$0xff]
  %v1184 = vld [vmem:[#allocation3 + $0x108] sm:$0xff]
  %v1185 = vld [vmem:[#allocation3 + $0x110] sm:$0xff]
  %v1186 = vld [vmem:[#allocation3 + $0x118] sm:$0xff]
  %1188 = vset.pattern.permute.xlu0 0
  %1189 = vperm.xlu0 %1188, %v986
  %v1190 = vpop.permute.xlu0 %1189
  %v1193 = vsel %vm897, %v985, 0
  %1195 = vmatpush.msra.mxu0 0.0
  %1196 = vmatpush.msra.mxu0 0.0
  %1197 = vmatpush.msra.mxu0 0.0
  %1198 = vmatpush.msra.mxu0 0.0
  %1199 = vmatpush.msra.mxu0 0.0
  %1200 = vmatpush.msra.mxu0 0.0
  %1201 = vmatpush.msra.mxu0 0.0
  %1202 = vmatpush.msra.mxu0 %v1183
  %1203 = vmatpush.msra.mxu0 %v1179
  %1204 = vmatpush.msra.mxu0 %v1175
  %1205 = vmatpush.msra.mxu0 %v1171
  %1206 = vmatpush.msra.mxu0 %v1167
  %1207 = vmatpush.msra.mxu0 %v1163
  %1208 = vmatpush.msra.mxu0 %v1159
  %1209 = vmatpush.msra.mxu0 %v1155
  %1210 = vmatpush.msra.mxu0 %v1151
  %1211 = vmatmul.f32.gmra.mxu0 %v1193
  %v1212 = vpop.f32.mrf.mxu0
  %v1213 = vadd.f32 %v1190, %v1212
  %1214 = vdwg.mxu0
  %1215 = vmatpush.msra.mxu0 0.0
  %1216 = vmatpush.msra.mxu0 0.0
  %1217 = vmatpush.msra.mxu0 0.0
  %1218 = vmatpush.msra.mxu0 0.0
  %1219 = vmatpush.msra.mxu0 0.0
  %1220 = vmatpush.msra.mxu0 0.0
  %1221 = vmatpush.msra.mxu0 0.0
  %1222 = vmatpush.msra.mxu0 %v1184
  %1223 = vmatpush.msra.mxu0 %v1180
  %1224 = vmatpush.msra.mxu0 %v1176
  %1225 = vmatpush.msra.mxu0 %v1172
  %1226 = vmatpush.msra.mxu0 %v1168
  %1227 = vmatpush.msra.mxu0 %v1164
  %1228 = vmatpush.msra.mxu0 %v1160
  %1229 = vmatpush.msra.mxu0 %v1156
  %1230 = vmatpush.msra.mxu0 %v1152
  %1231 = vmatmul.f32.gmra.mxu0 %v1193
  %v1232 = vpop.f32.mrf.mxu0
  %v1233 = vadd.f32 %v1190, %v1232
  %1234 = vdwg.mxu0
  %1235 = vmatpush.msra.mxu0 0.0
  %1236 = vmatpush.msra.mxu0 0.0
  %1237 = vmatpush.msra.mxu0 0.0
  %1238 = vmatpush.msra.mxu0 0.0
  %1239 = vmatpush.msra.mxu0 0.0
  %1240 = vmatpush.msra.mxu0 0.0
  %1241 = vmatpush.msra.mxu0 0.0
  %1242 = vmatpush.msra.mxu0 %v1185
  %1243 = vmatpush.msra.mxu0 %v1181
  %1244 = vmatpush.msra.mxu0 %v1177
  %1245 = vmatpush.msra.mxu0 %v1173
  %1246 = vmatpush.msra.mxu0 %v1169
  %1247 = vmatpush.msra.mxu0 %v1165
  %1248 = vmatpush.msra.mxu0 %v1161
  %1249 = vmatpush.msra.mxu0 %v1157
  %1250 = vmatpush.msra.mxu0 %v1153
  %1251 = vmatmul.f32.gmra.mxu0 %v1193
  %v1252 = vpop.f32.mrf.mxu0
  %v1253 = vadd.f32 %v1190, %v1252
  %1254 = vdwg.mxu0
  %1255 = vmatpush.msra.mxu0 0.0
  %1256 = vmatpush.msra.mxu0 0.0
  %1257 = vmatpush.msra.mxu0 0.0
  %1258 = vmatpush.msra.mxu0 0.0
  %1259 = vmatpush.msra.mxu0 0.0
  %1260 = vmatpush.msra.mxu0 0.0
  %1261 = vmatpush.msra.mxu0 0.0
  %1262 = vmatpush.msra.mxu0 %v1186
  %1263 = vmatpush.msra.mxu0 %v1182
  %1264 = vmatpush.msra.mxu0 %v1178
  %1265 = vmatpush.msra.mxu0 %v1174
  %1266 = vmatpush.msra.mxu0 %v1170
  %1267 = vmatpush.msra.mxu0 %v1166
  %1268 = vmatpush.msra.mxu0 %v1162
  %1269 = vmatpush.msra.mxu0 %v1158
  %1270 = vmatpush.msra.mxu0 %v1154
  %1271 = vmatmul.f32.gmra.mxu0 %v1193
  %v1272 = vpop.f32.mrf.mxu0
  %v1273 = vadd.f32 %v1190, %v1272
  %1274 = vdwg.mxu0
  %v1275 = vadd.f32 %v1213, %v108
  %v1276 = vadd.f32 %v1233, %v128
  %v1277 = vadd.f32 %v1253, %v148
  %v1278 = vadd.f32 %v1273, %v168
  %v1279 = vmax.f32 %v1275, 0.0
  %v1280 = vmax.f32 %v1276, 0.0
  %v1281 = vmax.f32 %v1277, 0.0
  %v1282 = vmax.f32 %v1278, 0.0
  %1283 = vst [vmem:[%s11] sm:$0xff] %v1279
  %1284 = vst [vmem:[%s11 + $0x8] sm:$0xff] %v1280
  %s1285 = scalar_lea.vmem %s11, 16
  %1286 = vst [vmem:[%s1285] sm:$0xff] %v1281
  %1287 = vst [vmem:[%s1285 + $0x8] sm:$0xff] %v1282
  // Predicated region
  $region46: #{color_residual_block.1} parent=0 // pred_check
    _
  $region47: #{color_residual_block.1} parent=0 // pred_check_branch
    %1289 = sbr.rel (0) target = $region49
  $region48: #{color_residual_block.1} parent=0 // pred_region
    _
  $region49: #{color_residual_block.1} parent=0 // pred_fallthru
    _
  // Predicated region
  $region50: #{color_residual_block.1} parent=0 // pred_check
    _
  $region51: #{color_residual_block.1} parent=0 // pred_check_branch
    %1291 = sbr.rel (0) target = $region53
  $region52: #{color_residual_block.1} parent=0 // pred_region
    _
  $region53: #{color_residual_block.1} parent=0 // pred_fallthru
    _

</llo_original>
